<compile_context>
chip_gen: v7x
topology: tpu7x:2x2x1
jax: 0.10.0
libtpu: 0.0.40
codegen_flags: <defaults>
</compile_context>

<pallas_src>
import functools

import jax
import jax.numpy as jnp
import numpy as np
from jax.experimental import pallas as pl
from jax.experimental.pallas import tpu as pltpu

# Problem sizes (small, consistent with the module's forward).
B = 4          # batch
E = 32         # embeddings_dim
L = 16         # sequence length
K = 9          # conv kernel size
PAD = K // 2
HID = 32       # hidden width of the linear head
OUT = 11       # output_dim
BN_EPS = 1e-5


# ----------------------------------------------------------------------------
# Single fused kernel:
#   9-tap conv contraction (both convs, no bias) -> masked mean via pooling
#   matmul / max over L -> select-combine -> Linear(+folded bias) -> ReLU ->
#   Linear(+folded BN).
# ----------------------------------------------------------------------------
def _fused_kernel(x_ref, p_ref, wc_ref, w1_ref, bias_ref, w2_ref, out_ref,
                  *, batch, seq_len, e_dim, ksize, out_dim):
    bl = batch * seq_len
    pad = ksize // 2
    x2 = x_ref[...]                                     # (B*L, E)
    w_all = wc_ref[...]                                 # (K*E, 2E)

    # Position of each row inside its sequence (for the zero-padding mask).
    pos = jax.lax.rem(
        jax.lax.broadcasted_iota(jnp.int32, (bl, e_dim), 0), seq_len)

    # Center tap (no shift, never out of bounds).
    y = jnp.dot(x2, w_all[pad * e_dim:(pad + 1) * e_dim, :],
                preferred_element_type=jnp.float32)     # (B*L, 2E)

    # Remaining 8 taps: sublane roll + validity mask + accumulating matmul.
    for k in range(ksize):
        d = k - pad
        if d == 0:
            continue
        w_k = w_all[k * e_dim:(k + 1) * e_dim, :]       # (E, 2E), aligned slice
        xk = pltpu.roll(x2, shift=(-d) % bl, axis=0)    # xk[r] = x2[r + d]
        valid = jnp.logical_and(pos + d >= 0, pos + d < seq_len)
        xk = jnp.where(valid, xk, 0.0)                  # zero conv padding
        y = y + jnp.dot(xk, w_k, preferred_element_type=jnp.float32)

    # Attention branch: masked mean over L as one small MXU matmul with the
    # precomputed block-diagonal pooling matrix P (B, B*L).
    mean_full = jnp.dot(p_ref[...], y, preferred_element_type=jnp.float32)

    # Feature branch: max over all L positions (padding included, as in torch).
    y3 = y.reshape(batch, seq_len, 2 * e_dim)           # layout-preserving
    max_full = jnp.max(y3, axis=1)                      # (B, 2E)

    # cols [0:E) = attention conv -> masked mean; cols [E:2E) = feature -> max.
    col = jax.lax.broadcasted_iota(jnp.int32, (batch, 2 * e_dim), 1)
    o = jnp.where(col < e_dim, mean_full, max_full)     # (B, 2E) == cat(o1, o2)

    # Head: Linear(+folded conv bias) -> ReLU -> Linear(+folded eval-BN).
    bias = bias_ref[...]                                # (2, HID)
    h = jnp.dot(o, w1_ref[...], preferred_element_type=jnp.float32)
    h = jnp.maximum(h + bias[0:1, :], 0.0)              # Dropout = identity
    out_ref[...] = (jnp.dot(h, w2_ref[...], preferred_element_type=jnp.float32)
                    + bias[1:2, :out_dim])


# ----------------------------------------------------------------------------
# One-time weight preprocessing (run at weight-load time, NOT per call).
# ----------------------------------------------------------------------------
def prepare_params(params):
    wf, bf, wa, ba, w1, b1, gamma, beta, rmean, rvar, w2, b2 = params
    e_dim, _, ks = wf.shape
    hid = w1.shape[1]

    # torch conv weight [E_out, E_in, K] -> per-tap matmul layout [K*E_in, E_out];
    # attention conv in cols [0:E), feature conv in cols [E:2E).
    wa_unf = jnp.transpose(wa, (2, 1, 0)).reshape(ks * e_dim, e_dim)
    wf_unf = jnp.transpose(wf, (2, 1, 0)).reshape(ks * e_dim, e_dim)
    w_conv = jnp.concatenate([wa_unf, wf_unf], axis=1)            # (K*E, 2E)

    # Fold conv biases into the first linear's bias:
    #   masked-mean(y + b) = masked-mean(y) + b ;  max_l(y + b) = max_l(y) + b
    b_conv = jnp.concatenate([ba, bf])                            # (2E,)
    b1_fold = b_conv @ w1 + b1                                    # (HID,)

    # Fold eval-mode BatchNorm1d into the output linear.
    scale = gamma * jax.lax.rsqrt(rvar + BN_EPS)                  # (HID,)
    w2_fold = scale[:, None] * w2                                 # (HID, OUT)
    b2_fold = (beta - rmean * scale) @ w2 + b2                    # (OUT,)

    # Stack the two small bias vectors into ONE kernel input.
    bias_stack = jnp.zeros((2, hid), jnp.float32)
    bias_stack = bias_stack.at[0, :].set(b1_fold.astype(jnp.float32))
    bias_stack = bias_stack.at[1, :b2_fold.shape[0]].set(
        b2_fold.astype(jnp.float32))

    return (w_conv.astype(jnp.float32), w1.astype(jnp.float32),
            bias_stack, w2_fold.astype(jnp.float32))


# ----------------------------------------------------------------------------
# Per-call wrapper (jit this): tiny x transpose + pooling matrix + one kernel.
# ----------------------------------------------------------------------------
def light_attention_forward(x, mask, prepared):
    """x: [B, E, L] float32, mask: [B, L] (bool/float). Returns [B, OUT]."""
    w_conv, w1, bias_stack, w2_fold = prepared
    b_sz, e_dim, l_len = x.shape
    hid = w1.shape[1]
    out_dim = w2_fold.shape[1]
    ks = w_conv.shape[0] // e_dim

    # channels-last, flattened rows; no im2col / no HBM intermediate.
    x2 = jnp.transpose(x, (0, 2, 1)).astype(jnp.float32).reshape(
        b_sz * l_len, e_dim)

    # Block-diagonal pooling matrix P[b, b*L + l] = mask[b, l] / length[b].
    # Guard against an all-padding row (PyTorch would produce NaN there);
    # lengths are > 0 in practice so this does not change results.
    mask_f = mask.astype(jnp.float32)                              # (B, L)
    denom = jnp.maximum(jnp.sum(mask_f, axis=1, keepdims=True), 1.0)
    p_rows = mask_f / denom
    pool = (jnp.eye(b_sz, dtype=jnp.float32)[:, :, None]
            * p_rows[None, :, :]).reshape(b_sz, b_sz * l_len)      # (B, B*L)

    kernel = functools.partial(_fused_kernel, batch=b_sz, seq_len=l_len,
                               e_dim=e_dim, ksize=ks, out_dim=out_dim)
    return pl.pallas_call(
        kernel,
        out_shape=jax.ShapeDtypeStruct((b_sz, out_dim), jnp.float32),
        grid=(1,),
        in_specs=[
            pl.BlockSpec((b_sz * l_len, e_dim), lambda i: (0, 0)),   # x2
            pl.BlockSpec((b_sz, b_sz * l_len), lambda i: (0, 0)),    # pool
            pl.BlockSpec((ks * e_dim, 2 * e_dim), lambda i: (0, 0)), # w_conv
            pl.BlockSpec((2 * e_dim, hid), lambda i: (0, 0)),        # w1
            pl.BlockSpec((2, hid), lambda i: (0, 0)),                # bias_stack
            pl.BlockSpec((hid, out_dim), lambda i: (0, 0)),          # w2_fold
        ],
        out_specs=pl.BlockSpec((b_sz, out_dim), lambda i: (0, 0)),
        compiler_params=pltpu.CompilerParams(
            dimension_semantics=("arbitrary",)),
    )(x2, pool, w_conv, w1, bias_stack, w2_fold)


# ----------------------------------------------------------------------------
# Pure-JAX reference (unfused: lax conv + explicit BN) for correctness check.
# ----------------------------------------------------------------------------
def reference_forward(x, mask, params):
    wf, bf, wa, ba, w1, b1, gamma, beta, rmean, rvar, w2, b2 = params
    dn = ("NCH", "OIH", "NCH")
    o = jax.lax.conv_general_dilated(x, wf, (1,), [(PAD, PAD)],
                                     dimension_numbers=dn) + bf[None, :, None]
    a = jax.lax.conv_general_dilated(x, wa, (1,), [(PAD, PAD)],
                                     dimension_numbers=dn) + ba[None, :, None]
    m = mask.astype(jnp.float32)[:, None, :]
    o1 = jnp.sum(a * m, axis=-1) / jnp.sum(m, axis=-1)
    o2 = jnp.max(o, axis=-1)
    oc = jnp.concatenate([o1, o2], axis=-1)
    h = jnp.maximum(oc @ w1 + b1, 0.0)
    h = (h - rmean) / jnp.sqrt(rvar + BN_EPS) * gamma + beta
    return h @ w2 + b2


def make_params(key):
    ks = jax.random.split(key, 12)
    wf = 0.05 * jax.random.normal(ks[0], (E, E, K), jnp.float32)   # conv [O,I,K]
    bf = 0.05 * jax.random.normal(ks[1], (E,), jnp.float32)
    wa = 0.05 * jax.random.normal(ks[2], (E, E, K), jnp.float32)
    ba = 0.05 * jax.random.normal(ks[3], (E,), jnp.float32)
    w1 = 0.05 * jax.random.normal(ks[4], (2 * E, HID), jnp.float32)
    b1 = 0.05 * jax.random.normal(ks[5], (HID,), jnp.float32)
    gamma = 1.0 + 0.1 * jax.random.normal(ks[6], (HID,), jnp.float32)
    beta = 0.1 * jax.random.normal(ks[7], (HID,), jnp.float32)
    rmean = 0.1 * jax.random.normal(ks[8], (HID,), jnp.float32)
    rvar = 1.0 + 0.1 * jnp.abs(jax.random.normal(ks[9], (HID,), jnp.float32))
    w2 = 0.05 * jax.random.normal(ks[10], (HID, OUT), jnp.float32)
    b2 = 0.05 * jax.random.normal(ks[11], (OUT,), jnp.float32)
    return (wf, bf, wa, ba, w1, b1, gamma, beta, rmean, rvar, w2, b2)


if __name__ == "__main__":
    key = jax.random.PRNGKey(0)
    kx, km, kp = jax.random.split(key, 3)
    params = make_params(kp)
    prepared = prepare_params(params)        # one-time, outside the jitted path

    # x: [B, E, L]; mask: True for valid positions, padded tail zeroed in x.
    lengths = jnp.array([16, 12, 9, 5], dtype=jnp.int32)
    pos = jnp.arange(L)[None, :]
    mask = pos < lengths[:, None]                                   # [B, L] bool
    x = jax.random.normal(kx, (B, E, L), jnp.float32)
    x = x * mask.astype(jnp.float32)[:, None, :]                    # zero padding

    fwd = jax.jit(light_attention_forward)
    out = fwd(x, mask, prepared)
    out = jax.block_until_ready(out)

    ref = reference_forward(x, mask, params)
    np.testing.assert_allclose(np.asarray(out), np.asarray(ref),
                               rtol=1e-4, atol=1e-4)
    assert out.shape == (B, OUT)
    # TODO(synk): BatchNorm1d is implemented in eval mode (running stats folded
    # into the output linear) and Dropout as identity; training-mode batch
    # statistics / dropout RNG are not modeled.
    print("KERNEL_OK")
</pallas_src>

<mosaic_0001>
module attributes {stable_mosaic.version = 11 : i64} {
  func.func @_fused_kernel(%arg0: i32, %arg1: memref<64x32xf32, #tpu.memory_space<vmem>>, %arg2: memref<4x64xf32, #tpu.memory_space<vmem>>, %arg3: memref<288x64xf32, #tpu.memory_space<vmem>>, %arg4: memref<64x32xf32, #tpu.memory_space<vmem>>, %arg5: memref<2x32xf32, #tpu.memory_space<vmem>>, %arg6: memref<32x11xf32, #tpu.memory_space<vmem>>, %arg7: memref<4x11xf32, #tpu.memory_space<vmem>>) attributes {dimension_semantics = [#tpu.dimension_semantics<arbitrary>], iteration_bounds = array<i64: 1>, scalar_prefetch = 0 : i64, scratch_operands = 0 : i64, tpu.core_type = #tpu.core_type<tc>, window_params = [{pipeline_mode = #tpu.pipeline_mode<synchronous>, transform_indices = @transform_0, window_bounds = array<i64: 64, 32>}, {pipeline_mode = #tpu.pipeline_mode<synchronous>, transform_indices = @transform_1, window_bounds = array<i64: 4, 64>}, {pipeline_mode = #tpu.pipeline_mode<synchronous>, transform_indices = @transform_2, window_bounds = array<i64: 288, 64>}, {pipeline_mode = #tpu.pipeline_mode<synchronous>, transform_indices = @transform_3, window_bounds = array<i64: 64, 32>}, {pipeline_mode = #tpu.pipeline_mode<synchronous>, transform_indices = @transform_4, window_bounds = array<i64: 2, 32>}, {pipeline_mode = #tpu.pipeline_mode<synchronous>, transform_indices = @transform_5, window_bounds = array<i64: 32, 11>}, {pipeline_mode = #tpu.pipeline_mode<synchronous>, transform_indices = @transform_6, window_bounds = array<i64: 4, 11>}]} {
    %c0 = arith.constant 0 : index
    %c0_0 = arith.constant 0 : index
    %0 = vector.load %arg1[%c0, %c0_0] : memref<64x32xf32, #tpu.memory_space<vmem>>, vector<64x32xf32>
    %c0_1 = arith.constant 0 : index
    %c0_2 = arith.constant 0 : index
    %1 = vector.load %arg3[%c0_1, %c0_2] : memref<288x64xf32, #tpu.memory_space<vmem>>, vector<288x64xf32>
    %2 = tpu.iota {dimensions = array<i32: 0>} : vector<64x32xi32>
    %c16_i32 = arith.constant 16 : i32
    %3 = vector.broadcast %c16_i32 : i32 to vector<64x32xi32>
    %4 = arith.remsi %2, %3 : vector<64x32xi32>
    %5 = vector.extract_strided_slice %1 {offsets = [128, 0], sizes = [32, 64], strides = [1, 1]} : vector<288x64xf32> to vector<32x64xf32>
    %cst = arith.constant dense<0.000000e+00> : vector<64x64xf32>
    %6 = tpu.matmul %0, %5, %cst {dimension_numbers = #tpu.dot_dimension_numbers<[1], [0], [0], [1], [0, 0, 1, 1], [], []>} : vector<64x32xf32>, vector<32x64xf32>, vector<64x64xf32> -> vector<64x64xf32>
    %7 = vector.extract_strided_slice %1 {offsets = [0, 0], sizes = [32, 64], strides = [1, 1]} : vector<288x64xf32> to vector<32x64xf32>
    %c4_i32 = arith.constant 4 : i32
    %8 = tpu.dynamic_rotate %0 by %c4_i32 dim 0 : vector<64x32xf32>, i32 -> vector<64x32xf32>
    %c-4_i32 = arith.constant -4 : i32
    %9 = vector.broadcast %c-4_i32 : i32 to vector<64x32xi32>
    %10 = arith.addi %4, %9 : vector<64x32xi32>
    %c0_i32 = arith.constant 0 : i32
    %11 = vector.broadcast %c0_i32 : i32 to vector<64x32xi32>
    %12 = arith.cmpi sge, %10, %11 : vector<64x32xi32>
    %c-4_i32_3 = arith.constant -4 : i32
    %13 = vector.broadcast %c-4_i32_3 : i32 to vector<64x32xi32>
    %14 = arith.addi %4, %13 : vector<64x32xi32>
    %c16_i32_4 = arith.constant 16 : i32
    %15 = vector.broadcast %c16_i32_4 : i32 to vector<64x32xi32>
    %16 = arith.cmpi slt, %14, %15 : vector<64x32xi32>
    %17 = arith.andi %12, %16 : vector<64x32xi1>
    %cst_5 = arith.constant 0.000000e+00 : f32
    %18 = vector.broadcast %cst_5 : f32 to vector<64x32xf32>
    %19 = arith.select %17, %8, %18 : vector<64x32xi1>, vector<64x32xf32>
    %cst_6 = arith.constant dense<0.000000e+00> : vector<64x64xf32>
    %20 = tpu.matmul %19, %7, %cst_6 {dimension_numbers = #tpu.dot_dimension_numbers<[1], [0], [0], [1], [0, 0, 1, 1], [], []>} : vector<64x32xf32>, vector<32x64xf32>, vector<64x64xf32> -> vector<64x64xf32>
    %21 = arith.addf %6, %20 : vector<64x64xf32>
    %22 = vector.extract_strided_slice %1 {offsets = [32, 0], sizes = [32, 64], strides = [1, 1]} : vector<288x64xf32> to vector<32x64xf32>
    %c3_i32 = arith.constant 3 : i32
    %23 = tpu.dynamic_rotate %0 by %c3_i32 dim 0 : vector<64x32xf32>, i32 -> vector<64x32xf32>
    %c-3_i32 = arith.constant -3 : i32
    %24 = vector.broadcast %c-3_i32 : i32 to vector<64x32xi32>
    %25 = arith.addi %4, %24 : vector<64x32xi32>
    %c0_i32_7 = arith.constant 0 : i32
    %26 = vector.broadcast %c0_i32_7 : i32 to vector<64x32xi32>
    %27 = arith.cmpi sge, %25, %26 : vector<64x32xi32>
    %c-3_i32_8 = arith.constant -3 : i32
    %28 = vector.broadcast %c-3_i32_8 : i32 to vector<64x32xi32>
    %29 = arith.addi %4, %28 : vector<64x32xi32>
    %c16_i32_9 = arith.constant 16 : i32
    %30 = vector.broadcast %c16_i32_9 : i32 to vector<64x32xi32>
    %31 = arith.cmpi slt, %29, %30 : vector<64x32xi32>
    %32 = arith.andi %27, %31 : vector<64x32xi1>
    %cst_10 = arith.constant 0.000000e+00 : f32
    %33 = vector.broadcast %cst_10 : f32 to vector<64x32xf32>
    %34 = arith.select %32, %23, %33 : vector<64x32xi1>, vector<64x32xf32>
    %cst_11 = arith.constant dense<0.000000e+00> : vector<64x64xf32>
    %35 = tpu.matmul %34, %22, %cst_11 {dimension_numbers = #tpu.dot_dimension_numbers<[1], [0], [0], [1], [0, 0, 1, 1], [], []>} : vector<64x32xf32>, vector<32x64xf32>, vector<64x64xf32> -> vector<64x64xf32>
    %36 = arith.addf %21, %35 : vector<64x64xf32>
    %37 = vector.extract_strided_slice %1 {offsets = [64, 0], sizes = [32, 64], strides = [1, 1]} : vector<288x64xf32> to vector<32x64xf32>
    %c2_i32 = arith.constant 2 : i32
    %38 = tpu.dynamic_rotate %0 by %c2_i32 dim 0 : vector<64x32xf32>, i32 -> vector<64x32xf32>
    %c-2_i32 = arith.constant -2 : i32
    %39 = vector.broadcast %c-2_i32 : i32 to vector<64x32xi32>
    %40 = arith.addi %4, %39 : vector<64x32xi32>
    %c0_i32_12 = arith.constant 0 : i32
    %41 = vector.broadcast %c0_i32_12 : i32 to vector<64x32xi32>
    %42 = arith.cmpi sge, %40, %41 : vector<64x32xi32>
    %c-2_i32_13 = arith.constant -2 : i32
    %43 = vector.broadcast %c-2_i32_13 : i32 to vector<64x32xi32>
    %44 = arith.addi %4, %43 : vector<64x32xi32>
    %c16_i32_14 = arith.constant 16 : i32
    %45 = vector.broadcast %c16_i32_14 : i32 to vector<64x32xi32>
    %46 = arith.cmpi slt, %44, %45 : vector<64x32xi32>
    %47 = arith.andi %42, %46 : vector<64x32xi1>
    %cst_15 = arith.constant 0.000000e+00 : f32
    %48 = vector.broadcast %cst_15 : f32 to vector<64x32xf32>
    %49 = arith.select %47, %38, %48 : vector<64x32xi1>, vector<64x32xf32>
    %cst_16 = arith.constant dense<0.000000e+00> : vector<64x64xf32>
    %50 = tpu.matmul %49, %37, %cst_16 {dimension_numbers = #tpu.dot_dimension_numbers<[1], [0], [0], [1], [0, 0, 1, 1], [], []>} : vector<64x32xf32>, vector<32x64xf32>, vector<64x64xf32> -> vector<64x64xf32>
    %51 = arith.addf %36, %50 : vector<64x64xf32>
    %52 = vector.extract_strided_slice %1 {offsets = [96, 0], sizes = [32, 64], strides = [1, 1]} : vector<288x64xf32> to vector<32x64xf32>
    %c1_i32 = arith.constant 1 : i32
    %53 = tpu.dynamic_rotate %0 by %c1_i32 dim 0 : vector<64x32xf32>, i32 -> vector<64x32xf32>
    %c-1_i32 = arith.constant -1 : i32
    %54 = vector.broadcast %c-1_i32 : i32 to vector<64x32xi32>
    %55 = arith.addi %4, %54 : vector<64x32xi32>
    %c0_i32_17 = arith.constant 0 : i32
    %56 = vector.broadcast %c0_i32_17 : i32 to vector<64x32xi32>
    %57 = arith.cmpi sge, %55, %56 : vector<64x32xi32>
    %c-1_i32_18 = arith.constant -1 : i32
    %58 = vector.broadcast %c-1_i32_18 : i32 to vector<64x32xi32>
    %59 = arith.addi %4, %58 : vector<64x32xi32>
    %c16_i32_19 = arith.constant 16 : i32
    %60 = vector.broadcast %c16_i32_19 : i32 to vector<64x32xi32>
    %61 = arith.cmpi slt, %59, %60 : vector<64x32xi32>
    %62 = arith.andi %57, %61 : vector<64x32xi1>
    %cst_20 = arith.constant 0.000000e+00 : f32
    %63 = vector.broadcast %cst_20 : f32 to vector<64x32xf32>
    %64 = arith.select %62, %53, %63 : vector<64x32xi1>, vector<64x32xf32>
    %cst_21 = arith.constant dense<0.000000e+00> : vector<64x64xf32>
    %65 = tpu.matmul %64, %52, %cst_21 {dimension_numbers = #tpu.dot_dimension_numbers<[1], [0], [0], [1], [0, 0, 1, 1], [], []>} : vector<64x32xf32>, vector<32x64xf32>, vector<64x64xf32> -> vector<64x64xf32>
    %66 = arith.addf %51, %65 : vector<64x64xf32>
    %67 = vector.extract_strided_slice %1 {offsets = [160, 0], sizes = [32, 64], strides = [1, 1]} : vector<288x64xf32> to vector<32x64xf32>
    %c63_i32 = arith.constant 63 : i32
    %68 = tpu.dynamic_rotate %0 by %c63_i32 dim 0 : vector<64x32xf32>, i32 -> vector<64x32xf32>
    %c1_i32_22 = arith.constant 1 : i32
    %69 = vector.broadcast %c1_i32_22 : i32 to vector<64x32xi32>
    %70 = arith.addi %4, %69 : vector<64x32xi32>
    %c0_i32_23 = arith.constant 0 : i32
    %71 = vector.broadcast %c0_i32_23 : i32 to vector<64x32xi32>
    %72 = arith.cmpi sge, %70, %71 : vector<64x32xi32>
    %c1_i32_24 = arith.constant 1 : i32
    %73 = vector.broadcast %c1_i32_24 : i32 to vector<64x32xi32>
    %74 = arith.addi %4, %73 : vector<64x32xi32>
    %c16_i32_25 = arith.constant 16 : i32
    %75 = vector.broadcast %c16_i32_25 : i32 to vector<64x32xi32>
    %76 = arith.cmpi slt, %74, %75 : vector<64x32xi32>
    %77 = arith.andi %72, %76 : vector<64x32xi1>
    %cst_26 = arith.constant 0.000000e+00 : f32
    %78 = vector.broadcast %cst_26 : f32 to vector<64x32xf32>
    %79 = arith.select %77, %68, %78 : vector<64x32xi1>, vector<64x32xf32>
    %cst_27 = arith.constant dense<0.000000e+00> : vector<64x64xf32>
    %80 = tpu.matmul %79, %67, %cst_27 {dimension_numbers = #tpu.dot_dimension_numbers<[1], [0], [0], [1], [0, 0, 1, 1], [], []>} : vector<64x32xf32>, vector<32x64xf32>, vector<64x64xf32> -> vector<64x64xf32>
    %81 = arith.addf %66, %80 : vector<64x64xf32>
    %82 = vector.extract_strided_slice %1 {offsets = [192, 0], sizes = [32, 64], strides = [1, 1]} : vector<288x64xf32> to vector<32x64xf32>
    %c62_i32 = arith.constant 62 : i32
    %83 = tpu.dynamic_rotate %0 by %c62_i32 dim 0 : vector<64x32xf32>, i32 -> vector<64x32xf32>
    %c2_i32_28 = arith.constant 2 : i32
    %84 = vector.broadcast %c2_i32_28 : i32 to vector<64x32xi32>
    %85 = arith.addi %4, %84 : vector<64x32xi32>
    %c0_i32_29 = arith.constant 0 : i32
    %86 = vector.broadcast %c0_i32_29 : i32 to vector<64x32xi32>
    %87 = arith.cmpi sge, %85, %86 : vector<64x32xi32>
    %c2_i32_30 = arith.constant 2 : i32
    %88 = vector.broadcast %c2_i32_30 : i32 to vector<64x32xi32>
    %89 = arith.addi %4, %88 : vector<64x32xi32>
    %c16_i32_31 = arith.constant 16 : i32
    %90 = vector.broadcast %c16_i32_31 : i32 to vector<64x32xi32>
    %91 = arith.cmpi slt, %89, %90 : vector<64x32xi32>
    %92 = arith.andi %87, %91 : vector<64x32xi1>
    %cst_32 = arith.constant 0.000000e+00 : f32
    %93 = vector.broadcast %cst_32 : f32 to vector<64x32xf32>
    %94 = arith.select %92, %83, %93 : vector<64x32xi1>, vector<64x32xf32>
    %cst_33 = arith.constant dense<0.000000e+00> : vector<64x64xf32>
    %95 = tpu.matmul %94, %82, %cst_33 {dimension_numbers = #tpu.dot_dimension_numbers<[1], [0], [0], [1], [0, 0, 1, 1], [], []>} : vector<64x32xf32>, vector<32x64xf32>, vector<64x64xf32> -> vector<64x64xf32>
    %96 = arith.addf %81, %95 : vector<64x64xf32>
    %97 = vector.extract_strided_slice %1 {offsets = [224, 0], sizes = [32, 64], strides = [1, 1]} : vector<288x64xf32> to vector<32x64xf32>
    %c61_i32 = arith.constant 61 : i32
    %98 = tpu.dynamic_rotate %0 by %c61_i32 dim 0 : vector<64x32xf32>, i32 -> vector<64x32xf32>
    %c3_i32_34 = arith.constant 3 : i32
    %99 = vector.broadcast %c3_i32_34 : i32 to vector<64x32xi32>
    %100 = arith.addi %4, %99 : vector<64x32xi32>
    %c0_i32_35 = arith.constant 0 : i32
    %101 = vector.broadcast %c0_i32_35 : i32 to vector<64x32xi32>
    %102 = arith.cmpi sge, %100, %101 : vector<64x32xi32>
    %c3_i32_36 = arith.constant 3 : i32
    %103 = vector.broadcast %c3_i32_36 : i32 to vector<64x32xi32>
    %104 = arith.addi %4, %103 : vector<64x32xi32>
    %c16_i32_37 = arith.constant 16 : i32
    %105 = vector.broadcast %c16_i32_37 : i32 to vector<64x32xi32>
    %106 = arith.cmpi slt, %104, %105 : vector<64x32xi32>
    %107 = arith.andi %102, %106 : vector<64x32xi1>
    %cst_38 = arith.constant 0.000000e+00 : f32
    %108 = vector.broadcast %cst_38 : f32 to vector<64x32xf32>
    %109 = arith.select %107, %98, %108 : vector<64x32xi1>, vector<64x32xf32>
    %cst_39 = arith.constant dense<0.000000e+00> : vector<64x64xf32>
    %110 = tpu.matmul %109, %97, %cst_39 {dimension_numbers = #tpu.dot_dimension_numbers<[1], [0], [0], [1], [0, 0, 1, 1], [], []>} : vector<64x32xf32>, vector<32x64xf32>, vector<64x64xf32> -> vector<64x64xf32>
    %111 = arith.addf %96, %110 : vector<64x64xf32>
    %112 = vector.extract_strided_slice %1 {offsets = [256, 0], sizes = [32, 64], strides = [1, 1]} : vector<288x64xf32> to vector<32x64xf32>
    %c60_i32 = arith.constant 60 : i32
    %113 = tpu.dynamic_rotate %0 by %c60_i32 dim 0 : vector<64x32xf32>, i32 -> vector<64x32xf32>
    %c4_i32_40 = arith.constant 4 : i32
    %114 = vector.broadcast %c4_i32_40 : i32 to vector<64x32xi32>
    %115 = arith.addi %4, %114 : vector<64x32xi32>
    %c0_i32_41 = arith.constant 0 : i32
    %116 = vector.broadcast %c0_i32_41 : i32 to vector<64x32xi32>
    %117 = arith.cmpi sge, %115, %116 : vector<64x32xi32>
    %c4_i32_42 = arith.constant 4 : i32
    %118 = vector.broadcast %c4_i32_42 : i32 to vector<64x32xi32>
    %119 = arith.addi %4, %118 : vector<64x32xi32>
    %c16_i32_43 = arith.constant 16 : i32
    %120 = vector.broadcast %c16_i32_43 : i32 to vector<64x32xi32>
    %121 = arith.cmpi slt, %119, %120 : vector<64x32xi32>
    %122 = arith.andi %117, %121 : vector<64x32xi1>
    %cst_44 = arith.constant 0.000000e+00 : f32
    %123 = vector.broadcast %cst_44 : f32 to vector<64x32xf32>
    %124 = arith.select %122, %113, %123 : vector<64x32xi1>, vector<64x32xf32>
    %cst_45 = arith.constant dense<0.000000e+00> : vector<64x64xf32>
    %125 = tpu.matmul %124, %112, %cst_45 {dimension_numbers = #tpu.dot_dimension_numbers<[1], [0], [0], [1], [0, 0, 1, 1], [], []>} : vector<64x32xf32>, vector<32x64xf32>, vector<64x64xf32> -> vector<64x64xf32>
    %126 = arith.addf %111, %125 : vector<64x64xf32>
    %c0_46 = arith.constant 0 : index
    %c0_47 = arith.constant 0 : index
    %127 = vector.load %arg2[%c0_46, %c0_47] : memref<4x64xf32, #tpu.memory_space<vmem>>, vector<4x64xf32>
    %cst_48 = arith.constant dense<0.000000e+00> : vector<4x64xf32>
    %128 = tpu.matmul %127, %126, %cst_48 {dimension_numbers = #tpu.dot_dimension_numbers<[1], [0], [0], [1], [0, 0, 1, 1], [], []>} : vector<4x64xf32>, vector<64x64xf32>, vector<4x64xf32> -> vector<4x64xf32>
    %129 = vector.shape_cast %126 : vector<64x64xf32> to vector<4x16x64xf32>
    %cst_49 = arith.constant dense<0xFF800000> : vector<4x64xf32>
    %130 = vector.multi_reduction <maximumf>, %129, %cst_49 [1] : vector<4x16x64xf32> to vector<4x64xf32>
    %131 = tpu.iota {dimensions = array<i32: 1>} : vector<4x64xi32>
    %c32_i32 = arith.constant 32 : i32
    %132 = vector.broadcast %c32_i32 : i32 to vector<4x64xi32>
    %133 = arith.cmpi slt, %131, %132 : vector<4x64xi32>
    %134 = arith.select %133, %128, %130 : vector<4x64xi1>, vector<4x64xf32>
    %c0_50 = arith.constant 0 : index
    %c0_51 = arith.constant 0 : index
    %135 = vector.load %arg5[%c0_50, %c0_51] : memref<2x32xf32, #tpu.memory_space<vmem>>, vector<2x32xf32>
    %c0_52 = arith.constant 0 : index
    %c0_53 = arith.constant 0 : index
    %136 = vector.load %arg4[%c0_52, %c0_53] : memref<64x32xf32, #tpu.memory_space<vmem>>, vector<64x32xf32>
    %cst_54 = arith.constant dense<0.000000e+00> : vector<4x32xf32>
    %137 = tpu.matmul %134, %136, %cst_54 {dimension_numbers = #tpu.dot_dimension_numbers<[1], [0], [0], [1], [0, 0, 1, 1], [], []>} : vector<4x64xf32>, vector<64x32xf32>, vector<4x32xf32> -> vector<4x32xf32>
    %138 = vector.extract_strided_slice %135 {offsets = [0, 0], sizes = [1, 32], strides = [1, 1]} : vector<2x32xf32> to vector<1x32xf32>
    %139 = vector.broadcast %138 : vector<1x32xf32> to vector<4x32xf32>
    %140 = arith.addf %137, %139 : vector<4x32xf32>
    %cst_55 = arith.constant 0.000000e+00 : f32
    %141 = vector.broadcast %cst_55 : f32 to vector<4x32xf32>
    %142 = arith.maximumf %140, %141 : vector<4x32xf32>
    %c0_56 = arith.constant 0 : index
    %c0_57 = arith.constant 0 : index
    %143 = vector.load %arg6[%c0_56, %c0_57] : memref<32x11xf32, #tpu.memory_space<vmem>>, vector<32x11xf32>
    %cst_58 = arith.constant dense<0.000000e+00> : vector<4x11xf32>
    %144 = tpu.matmul %142, %143, %cst_58 {dimension_numbers = #tpu.dot_dimension_numbers<[1], [0], [0], [1], [0, 0, 1, 1], [], []>} : vector<4x32xf32>, vector<32x11xf32>, vector<4x11xf32> -> vector<4x11xf32>
    %145 = vector.extract_strided_slice %135 {offsets = [1, 0], sizes = [1, 11], strides = [1, 1]} : vector<2x32xf32> to vector<1x11xf32>
    %146 = vector.broadcast %145 : vector<1x11xf32> to vector<4x11xf32>
    %147 = arith.addf %144, %146 : vector<4x11xf32>
    %c0_59 = arith.constant 0 : index
    %c0_60 = arith.constant 0 : index
    %148 = vector.load %arg7[%c0_59, %c0_60] : memref<4x11xf32, #tpu.memory_space<vmem>>, vector<4x11xf32>
    tpu.vector_store %arg7[%c0_59, %c0_60], %147 {strides = array<i32>} : memref<4x11xf32, #tpu.memory_space<vmem>>, vector<4x11xf32>,
    return
  }
  func.func @transform_0(%arg0: i32) -> (i32, i32) {
    %c0_i32 = arith.constant 0 : i32
    %c0_i32_0 = arith.constant 0 : i32
    %c0_i32_1 = arith.constant 0 : i32
    return %c0_i32, %c0_i32_0 : i32, i32
  }
  func.func @transform_1(%arg0: i32) -> (i32, i32) {
    %c0_i32 = arith.constant 0 : i32
    %c0_i32_0 = arith.constant 0 : i32
    %c0_i32_1 = arith.constant 0 : i32
    return %c0_i32, %c0_i32_0 : i32, i32
  }
  func.func @transform_2(%arg0: i32) -> (i32, i32) {
    %c0_i32 = arith.constant 0 : i32
    %c0_i32_0 = arith.constant 0 : i32
    %c0_i32_1 = arith.constant 0 : i32
    return %c0_i32, %c0_i32_0 : i32, i32
  }
  func.func @transform_3(%arg0: i32) -> (i32, i32) {
    %c0_i32 = arith.constant 0 : i32
    %c0_i32_0 = arith.constant 0 : i32
    %c0_i32_1 = arith.constant 0 : i32
    return %c0_i32, %c0_i32_0 : i32, i32
  }
  func.func @transform_4(%arg0: i32) -> (i32, i32) {
    %c0_i32 = arith.constant 0 : i32
    %c0_i32_0 = arith.constant 0 : i32
    %c0_i32_1 = arith.constant 0 : i32
    return %c0_i32, %c0_i32_0 : i32, i32
  }
  func.func @transform_5(%arg0: i32) -> (i32, i32) {
    %c0_i32 = arith.constant 0 : i32
    %c0_i32_0 = arith.constant 0 : i32
    %c0_i32_1 = arith.constant 0 : i32
    return %c0_i32, %c0_i32_0 : i32, i32
  }
  func.func @transform_6(%arg0: i32) -> (i32, i32) {
    %c0_i32 = arith.constant 0 : i32
    %c0_i32_0 = arith.constant 0 : i32
    %c0_i32_1 = arith.constant 0 : i32
    return %c0_i32, %c0_i32_0 : i32, i32
  }
}

</mosaic_0001>

<llo_original>
// kernel: light_attention_forward.1
$region0: #{light_attention_forward.1}
  #allocation0 [shape = 'u32[]', space=smem, size = 0x4, offset = 0x4, fixed_abs, tag = 'smem constant byte address 0x4 - core index']
  #allocation1 [shape = 'u32[144,128]{1,0:T(1,128)}', space=vmem, size = 0x12000, scoped, tag = 'internal scratch']
  %s0 = inlined_call_operand.vmem [shape: f32[64,32], index: 0, kind: input, shape index: {}]
  %s1 = inlined_call_operand.vmem [shape: f32[4,64], index: 1, kind: input, shape index: {}]
  %s2 = inlined_call_operand.vmem [shape: f32[288,64], index: 2, kind: input, shape index: {}]
  %s3 = inlined_call_operand.vmem [shape: f32[64,32], index: 3, kind: input, shape index: {}]
  %s4 = inlined_call_operand.vmem [shape: f32[2,32], index: 4, kind: input, shape index: {}]
  %s5 = inlined_call_operand.vmem [shape: f32[32,11], index: 5, kind: input, shape index: {}]
  %s6 = inlined_call_operand.hbm [shape: f32[4,11], index: 6, kind: output, shape index: {}]
  %s7 = sld [smem:[#allocation0]]
  $region34: #{light_attention_forward.1} parent=0
    _
  %s9 = ssub.s32 1, %s7
  %s10 = scalar_select 0, %s9, %s7
  $region1: #{light_attention_forward.1} parent=0
    #allocation2 [shape = 'u8[2048]{0}', space=vmem, size = 0x800, scoped, tag = 'output window, operand 0, single buffered']
    #allocation3 [shape = 's32[1]{0}', space=sflag, size = 0x4, scoped, tag = 'scoped memory for light_attention_forward.1']
    %11 = vsyncpa [#allocation3], 0
    // Predicated region
    $region2: #{light_attention_forward.1} parent=1 // pred_check
      _
    $region3: #{light_attention_forward.1} parent=1 // pred_check_branch
      %13 = sbr.rel (0) target = $region5
    $region4: #{light_attention_forward.1} parent=1 // pred_region
      _
    $region5: #{light_attention_forward.1} parent=1 // pred_fallthru
      _
    // Predicated region
    $region6: #{light_attention_forward.1} parent=1 // pred_check
      _
    $region7: #{light_attention_forward.1} parent=1 // pred_check_branch
      %15 = sbr.rel (0) target = $region9
    $region8: #{light_attention_forward.1} parent=1 // pred_region
      _
    $region9: #{light_attention_forward.1} parent=1 // pred_fallthru
      _
    // Predicated region
    $region10: #{light_attention_forward.1} parent=1 // pred_check
      _
    $region11: #{light_attention_forward.1} parent=1 // pred_check_branch
      %17 = sbr.rel (0) target = $region13
    $region12: #{light_attention_forward.1} parent=1 // pred_region
      _
    $region13: #{light_attention_forward.1} parent=1 // pred_fallthru
      _
    // Predicated region
    $region14: #{light_attention_forward.1} parent=1 // pred_check
      _
    $region15: #{light_attention_forward.1} parent=1 // pred_check_branch
      %19 = sbr.rel (0) target = $region17
    $region16: #{light_attention_forward.1} parent=1 // pred_region
      _
    $region17: #{light_attention_forward.1} parent=1 // pred_fallthru
      _
    // Predicated region
    $region18: #{light_attention_forward.1} parent=1 // pred_check
      _
    $region19: #{light_attention_forward.1} parent=1 // pred_check_branch
      %21 = sbr.rel (0) target = $region21
    $region20: #{light_attention_forward.1} parent=1 // pred_region
      _
    $region21: #{light_attention_forward.1} parent=1 // pred_fallthru
      _
    // Predicated region
    $region22: #{light_attention_forward.1} parent=1 // pred_check
      _
    $region23: #{light_attention_forward.1} parent=1 // pred_check_branch
      %23 = sbr.rel (0) target = $region25
    $region24: #{light_attention_forward.1} parent=1 // pred_region
      _
    $region25: #{light_attention_forward.1} parent=1 // pred_fallthru
      _
    %v24 = vld [vmem:[%s0] sm:$0xff]
    %v25 = vld [vmem:[%s0 + $0x8] sm:$0xff]
    %v26 = vld [vmem:[%s0 + $0x10] sm:$0xff]
    %v27 = vld [vmem:[%s0 + $0x18] sm:$0xff]
    %v28 = vld [vmem:[%s0 + $0x20] sm:$0xff]
    %v29 = vld [vmem:[%s0 + $0x28] sm:$0xff]
    %v30 = vld [vmem:[%s0 + $0x30] sm:$0xff]
    %v31 = vld [vmem:[%s0 + $0x38] sm:$0xff]
    %v32 = vld [vmem:[%s2] sm:$0xff]
    %v33 = vld [vmem:[%s2 + $0x8] sm:$0xff]
    %v34 = vld [vmem:[%s2 + $0x10] sm:$0xff]
    %v35 = vld [vmem:[%s2 + $0x18] sm:$0xff]
    %v36 = vld [vmem:[%s2 + $0x20] sm:$0xff]
    %v37 = vld [vmem:[%s2 + $0x28] sm:$0xff]
    %v38 = vld [vmem:[%s2 + $0x30] sm:$0xff]
    %v39 = vld [vmem:[%s2 + $0x38] sm:$0xff]
    %v40 = vld [vmem:[%s2 + $0x40] sm:$0xff]
    %v41 = vld [vmem:[%s2 + $0x48] sm:$0xff]
    %v42 = vld [vmem:[%s2 + $0x50] sm:$0xff]
    %v43 = vld [vmem:[%s2 + $0x58] sm:$0xff]
    %v44 = vld [vmem:[%s2 + $0x60] sm:$0xff]
    %v45 = vld [vmem:[%s2 + $0x68] sm:$0xff]
    %v46 = vld [vmem:[%s2 + $0x70] sm:$0xff]
    %v47 = vld [vmem:[%s2 + $0x78] sm:$0xff]
    %v48 = vld [vmem:[%s2 + $0x80] sm:$0xff]
    %v49 = vld [vmem:[%s2 + $0x88] sm:$0xff]
    %v50 = vld [vmem:[%s2 + $0x90] sm:$0xff]
    %v51 = vld [vmem:[%s2 + $0x98] sm:$0xff]
    %v52 = vld [vmem:[%s2 + $0xa0] sm:$0xff]
    %v53 = vld [vmem:[%s2 + $0xa8] sm:$0xff]
    %v54 = vld [vmem:[%s2 + $0xb0] sm:$0xff]
    %v55 = vld [vmem:[%s2 + $0xb8] sm:$0xff]
    %v56 = vld [vmem:[%s2 + $0xc0] sm:$0xff]
    %v57 = vld [vmem:[%s2 + $0xc8] sm:$0xff]
    %v58 = vld [vmem:[%s2 + $0xd0] sm:$0xff]
    %v59 = vld [vmem:[%s2 + $0xd8] sm:$0xff]
    %v60 = vld [vmem:[%s2 + $0xe0] sm:$0xff]
    %v61 = vld [vmem:[%s2 + $0xe8] sm:$0xff]
    %v62 = vld [vmem:[%s2 + $0xf0] sm:$0xff]
    %v63 = vld [vmem:[%s2 + $0xf8] sm:$0xff]
    %v64 = vld [vmem:[%s2 + $0x100] sm:$0xff]
    %v65 = vld [vmem:[%s2 + $0x108] sm:$0xff]
    %v66 = vld [vmem:[%s2 + $0x110] sm:$0xff]
    %v67 = vld [vmem:[%s2 + $0x118] sm:$0xff]
    %v68 = vlaneseq
    %v69 = vshrl.u32 %v68, 7
    %v70 = vadd.s32 %v69, 8
    %v71 = vadd.s32 %v69, 16
    %v72 = vadd.s32 %v69, 24
    %v73 = vadd.s32 %v69, 32
    %v74 = vadd.s32 %v69, 40
    %v75 = vadd.s32 %v69, 48
    %v76 = vadd.s32 %v69, 56
    %vm77 = vcmp.lt.s32.totalorder %v69, 0
    %v78 = vsub.s32 0, %v69
    %v79 = vsel %vm77, %v78, %v69
    %v80 = vshrl.u32 %v79, 4
    %v81 = vand.u32 %v79, 15
    %v82 = vsub.s32 0, %v81
    %v83 = vsel %vm77, %v82, %v81
    %vm84 = vcmp.lt.s32.totalorder %v70, 0
    %v85 = vsub.s32 0, %v70
    %v86 = vsel %vm84, %v85, %v70
    %v87 = vshrl.u32 %v86, 4
    %v88 = vand.u32 %v86, 15
    %v89 = vsub.s32 0, %v88
    %v90 = vsel %vm84, %v89, %v88
    %vm91 = vcmp.lt.s32.totalorder %v71, 0
    %v92 = vsub.s32 0, %v71
    %v93 = vsel %vm91, %v92, %v71
    %v94 = vshrl.u32 %v93, 4
    %v95 = vand.u32 %v93, 15
    %v96 = vsub.s32 0, %v95
    %v97 = vsel %vm91, %v96, %v95
    %vm98 = vcmp.lt.s32.totalorder %v72, 0
    %v99 = vsub.s32 0, %v72
    %v100 = vsel %vm98, %v99, %v72
    %v101 = vshrl.u32 %v100, 4
    %v102 = vand.u32 %v100, 15
    %v103 = vsub.s32 0, %v102
    %v104 = vsel %vm98, %v103, %v102
    %vm105 = vcmp.lt.s32.totalorder %v73, 0
    %v106 = vsub.s32 0, %v73
    %v107 = vsel %vm105, %v106, %v73
    %v108 = vshrl.u32 %v107, 4
    %v109 = vand.u32 %v107, 15
    %v110 = vsub.s32 0, %v109
    %v111 = vsel %vm105, %v110, %v109
    %vm112 = vcmp.lt.s32.totalorder %v74, 0
    %v113 = vsub.s32 0, %v74
    %v114 = vsel %vm112, %v113, %v74
    %v115 = vshrl.u32 %v114, 4
    %v116 = vand.u32 %v114, 15
    %v117 = vsub.s32 0, %v116
    %v118 = vsel %vm112, %v117, %v116
    %vm119 = vcmp.lt.s32.totalorder %v75, 0
    %v120 = vsub.s32 0, %v75
    %v121 = vsel %vm119, %v120, %v75
    %v122 = vshrl.u32 %v121, 4
    %v123 = vand.u32 %v121, 15
    %v124 = vsub.s32 0, %v123
    %v125 = vsel %vm119, %v124, %v123
    %vm126 = vcmp.lt.s32.totalorder %v76, 0
    %v127 = vsub.s32 0, %v76
    %v128 = vsel %vm126, %v127, %v76
    %v129 = vshrl.u32 %v128, 4
    %v130 = vand.u32 %v128, 15
    %v131 = vsub.s32 0, %v130
    %v132 = vsel %vm126, %v131, %v130
    %v133 = vrot.slane %v24, 4
    %v134 = vrot.slane %v25, 4
    %v135 = vrot.slane %v26, 4
    %v136 = vrot.slane %v27, 4
    %v137 = vrot.slane %v28, 4
    %v138 = vrot.slane %v29, 4
    %v139 = vrot.slane %v30, 4
    %v140 = vrot.slane %v31, 4
    %vm141 = vcmp.lt.s32.totalorder %v69, 4
    %v142 = vsel %vm141, %v139, %v140
    %v143 = vsel %vm141, %v138, %v139
    %v144 = vsel %vm141, %v137, %v138
    %v145 = vsel %vm141, %v136, %v137
    %v146 = vsel %vm141, %v135, %v136
    %v147 = vsel %vm141, %v134, %v135
    %v148 = vsel %vm141, %v133, %v134
    %v149 = vsel %vm141, %v140, %v133
    %v150 = vadd.s32 %v83, 4294967292
    %v151 = vadd.s32 %v90, 4294967292
    %v152 = vadd.s32 %v97, 4294967292
    %v153 = vadd.s32 %v104, 4294967292
    %v154 = vadd.s32 %v111, 4294967292
    %v155 = vadd.s32 %v118, 4294967292
    %v156 = vadd.s32 %v125, 4294967292
    %v157 = vadd.s32 %v132, 4294967292
    %vm158 = vcmp.ge.s32.totalorder %v150, 0
    %vm159 = vcmp.ge.s32.totalorder %v151, 0
    %vm160 = vcmp.ge.s32.totalorder %v152, 0
    %vm161 = vcmp.ge.s32.totalorder %v153, 0
    %vm162 = vcmp.ge.s32.totalorder %v154, 0
    %vm163 = vcmp.ge.s32.totalorder %v155, 0
    %vm164 = vcmp.ge.s32.totalorder %v156, 0
    %vm165 = vcmp.ge.s32.totalorder %v157, 0
    %vm166 = vcmp.lt.s32.totalorder %v150, 16
    %vm167 = vcmp.lt.s32.totalorder %v151, 16
    %vm168 = vcmp.lt.s32.totalorder %v152, 16
    %vm169 = vcmp.lt.s32.totalorder %v153, 16
    %vm170 = vcmp.lt.s32.totalorder %v154, 16
    %vm171 = vcmp.lt.s32.totalorder %v155, 16
    %vm172 = vcmp.lt.s32.totalorder %v156, 16
    %vm173 = vcmp.lt.s32.totalorder %v157, 16
    %vm174 = vmand %vm158, %vm166
    %vm175 = vmand %vm159, %vm167
    %vm176 = vmand %vm160, %vm168
    %vm177 = vmand %vm161, %vm169
    %vm178 = vmand %vm162, %vm170
    %vm179 = vmand %vm163, %vm171
    %vm180 = vmand %vm164, %vm172
    %vm181 = vmand %vm165, %vm173
    %v182 = vsel %vm174, %v149, 0.0
    %v183 = vsel %vm175, %v148, 0.0
    %v184 = vsel %vm176, %v147, 0.0
    %v185 = vsel %vm177, %v146, 0.0
    %v186 = vsel %vm178, %v145, 0.0
    %v187 = vsel %vm179, %v144, 0.0
    %v188 = vsel %vm180, %v143, 0.0
    %v189 = vsel %vm181, %v142, 0.0
    %vm190 = vcmask 261120
    %v192 = vsel %vm190, %v182, 0
    %v195 = vsel %vm190, %v183, 0
    %v198 = vsel %vm190, %v184, 0
    %v201 = vsel %vm190, %v185, 0
    %v204 = vsel %vm190, %v186, 0
    %v207 = vsel %vm190, %v187, 0
    %v210 = vsel %vm190, %v188, 0
    %v213 = vsel %vm190, %v189, 0
    %215 = vmatprep.subr.mxu0 0.0
    %216 = vmatpush1.msra.mxu0 %v32
    %217 = vmatprep.subr.mxu0 0.0
    %218 = vmatpush1.msra.mxu0 %v33
    %219 = vmatprep.subr.mxu0 0.0
    %220 = vmatpush1.msra.mxu0 %v34
    %221 = vmatprep.subr.mxu0 0.0
    %222 = vmatpush1.msra.mxu0 %v35
    %223 = vmatprep.subr.mxu0 0.0
    %224 = vmatpush1.msra.mxu0 0.0
    %225 = vmatprep.subr.mxu0 0.0
    %226 = vmatpush1.msra.mxu0 0.0
    %227 = vmatprep.subr.mxu0 0.0
    %228 = vmatpush1.msra.mxu0 0.0
    %229 = vmatprep.subr.mxu0 0.0
    %230 = vmatpush1.msra.mxu0 0.0
    %231 = vmatprep.subr.mxu0 0.0
    %232 = vmatpush1.msra.mxu0 0.0
    %233 = vmatprep.subr.mxu0 0.0
    %234 = vmatpush1.msra.mxu0 0.0
    %235 = vmatprep.subr.mxu0 0.0
    %236 = vmatpush1.msra.mxu0 0.0
    %237 = vmatprep.subr.mxu0 0.0
    %238 = vmatpush1.msra.mxu0 0.0
    %239 = vmatprep.subr.mxu0 0.0
    %240 = vmatpush1.msra.mxu0 0.0
    %241 = vmatprep.subr.mxu0 0.0
    %242 = vmatpush1.msra.mxu0 0.0
    %243 = vmatprep.subr.mxu0 0.0
    %244 = vmatpush1.msra.mxu0 0.0
    %245 = vmatprep.subr.mxu0 0.0
    %246 = vmatpush1.msra.mxu0 0.0
    %247 = vmatprep.subr.mxu0 0.0
    %248 = vmatpush1.msra.mxu0 0.0
    %249 = vmatprep.subr.mxu0 0.0
    %250 = vmatpush1.msra.mxu0 0.0
    %251 = vmatprep.subr.mxu0 0.0
    %252 = vmatpush1.msra.mxu0 0.0
    %253 = vmatprep.subr.mxu0 0.0
    %254 = vmatpush1.msra.mxu0 0.0
    %255 = vmatprep.subr.mxu0 0.0
    %256 = vmatpush1.msra.mxu0 0.0
    %257 = vmatprep.subr.mxu0 0.0
    %258 = vmatpush1.msra.mxu0 0.0
    %259 = vmatprep.subr.mxu0 0.0
    %260 = vmatpush1.msra.mxu0 0.0
    %261 = vmatprep.subr.mxu0 0.0
    %262 = vmatpush1.msra.mxu0 0.0
    %263 = vmatprep.subr.mxu0 0.0
    %264 = vmatpush1.msra.mxu0 0.0
    %265 = vmatprep.subr.mxu0 0.0
    %266 = vmatpush1.msra.mxu0 0.0
    %267 = vmatprep.subr.mxu0 0.0
    %268 = vmatpush1.msra.mxu0 0.0
    %269 = vmatprep.subr.mxu0 0.0
    %270 = vmatpush1.msra.mxu0 0.0
    %271 = vmatprep.subr.mxu0 0.0
    %272 = vmatpush1.msra.mxu0 0.0
    %273 = vmatprep.subr.mxu0 0.0
    %274 = vmatpush1.msra.mxu0 0.0
    %275 = vmatprep.subr.mxu0 0.0
    %276 = vmatpush1.msra.mxu0 0.0
    %277 = vmatprep.subr.mxu0 0.0
    %278 = vmatpush1.msra.mxu0 0.0
    %279 = vmatprep.mubr.f32.mxu0 0.0
    %280 = vmatmul.mubr.f32.gmra.mrb[0].mxu0 %v192
    %v281 = vpop.f32.mrb[0].mxu0
    %v282 = vadd.f32 0.0, %v281
    %v283 = vpop.f32.mrb[0].mxu0
    %284 = vmatprep.mubr.f32.mxu0 0.0
    %285 = vmatmul.mubr.f32.gmra.mrb[0].mxu0 %v195
    %v286 = vpop.f32.mrb[0].mxu0
    %v287 = vadd.f32 0.0, %v286
    %v288 = vpop.f32.mrb[0].mxu0
    %289 = vmatprep.mubr.f32.mxu0 0.0
    %290 = vmatmul.mubr.f32.gmra.mrb[0].mxu0 %v198
    %v291 = vpop.f32.mrb[0].mxu0
    %v292 = vadd.f32 0.0, %v291
    %v293 = vpop.f32.mrb[0].mxu0
    %294 = vmatprep.mubr.f32.mxu0 0.0
    %295 = vmatmul.mubr.f32.gmra.mrb[0].mxu0 %v201
    %v296 = vpop.f32.mrb[0].mxu0
    %v297 = vadd.f32 0.0, %v296
    %v298 = vpop.f32.mrb[0].mxu0
    %299 = vmatprep.mubr.f32.mxu0 0.0
    %300 = vmatmul.mubr.f32.gmra.mrb[0].mxu0 %v204
    %v301 = vpop.f32.mrb[0].mxu0
    %v302 = vadd.f32 0.0, %v301
    %v303 = vpop.f32.mrb[0].mxu0
    %304 = vmatprep.mubr.f32.mxu0 0.0
    %305 = vmatmul.mubr.f32.gmra.mrb[0].mxu0 %v207
    %v306 = vpop.f32.mrb[0].mxu0
    %v307 = vadd.f32 0.0, %v306
    %v308 = vpop.f32.mrb[0].mxu0
    %309 = vmatprep.mubr.f32.mxu0 0.0
    %310 = vmatmul.mubr.f32.gmra.mrb[0].mxu0 %v210
    %v311 = vpop.f32.mrb[0].mxu0
    %v312 = vadd.f32 0.0, %v311
    %v313 = vpop.f32.mrb[0].mxu0
    %314 = vmatprep.mubr.f32.mxu0 0.0
    %315 = vmatmul.mubr.f32.gmra.mrb[0].mxu0 %v213
    %v316 = vpop.f32.mrb[0].mxu0
    %v317 = vadd.f32 0.0, %v316
    %v318 = vpop.f32.mrb[0].mxu0
    %319 = vdwg.mxu0
    %v321 = vsel %vm190, %v24, 0
    %v324 = vsel %vm190, %v25, 0
    %v327 = vsel %vm190, %v26, 0
    %v330 = vsel %vm190, %v27, 0
    %v333 = vsel %vm190, %v28, 0
    %v336 = vsel %vm190, %v29, 0
    %v339 = vsel %vm190, %v30, 0
    %v342 = vsel %vm190, %v31, 0
    %344 = vmatprep.subr.mxu0 0.0
    %345 = vmatpush1.msra.mxu0 %v48
    %346 = vmatprep.subr.mxu0 0.0
    %347 = vmatpush1.msra.mxu0 %v49
    %348 = vmatprep.subr.mxu0 0.0
    %349 = vmatpush1.msra.mxu0 %v50
    %350 = vmatprep.subr.mxu0 0.0
    %351 = vmatpush1.msra.mxu0 %v51
    %352 = vmatprep.subr.mxu0 0.0
    %353 = vmatpush1.msra.mxu0 0.0
    %354 = vmatprep.subr.mxu0 0.0
    %355 = vmatpush1.msra.mxu0 0.0
    %356 = vmatprep.subr.mxu0 0.0
    %357 = vmatpush1.msra.mxu0 0.0
    %358 = vmatprep.subr.mxu0 0.0
    %359 = vmatpush1.msra.mxu0 0.0
    %360 = vmatprep.subr.mxu0 0.0
    %361 = vmatpush1.msra.mxu0 0.0
    %362 = vmatprep.subr.mxu0 0.0
    %363 = vmatpush1.msra.mxu0 0.0
    %364 = vmatprep.subr.mxu0 0.0
    %365 = vmatpush1.msra.mxu0 0.0
    %366 = vmatprep.subr.mxu0 0.0
    %367 = vmatpush1.msra.mxu0 0.0
    %368 = vmatprep.subr.mxu0 0.0
    %369 = vmatpush1.msra.mxu0 0.0
    %370 = vmatprep.subr.mxu0 0.0
    %371 = vmatpush1.msra.mxu0 0.0
    %372 = vmatprep.subr.mxu0 0.0
    %373 = vmatpush1.msra.mxu0 0.0
    %374 = vmatprep.subr.mxu0 0.0
    %375 = vmatpush1.msra.mxu0 0.0
    %376 = vmatprep.subr.mxu0 0.0
    %377 = vmatpush1.msra.mxu0 0.0
    %378 = vmatprep.subr.mxu0 0.0
    %379 = vmatpush1.msra.mxu0 0.0
    %380 = vmatprep.subr.mxu0 0.0
    %381 = vmatpush1.msra.mxu0 0.0
    %382 = vmatprep.subr.mxu0 0.0
    %383 = vmatpush1.msra.mxu0 0.0
    %384 = vmatprep.subr.mxu0 0.0
    %385 = vmatpush1.msra.mxu0 0.0
    %386 = vmatprep.subr.mxu0 0.0
    %387 = vmatpush1.msra.mxu0 0.0
    %388 = vmatprep.subr.mxu0 0.0
    %389 = vmatpush1.msra.mxu0 0.0
    %390 = vmatprep.subr.mxu0 0.0
    %391 = vmatpush1.msra.mxu0 0.0
    %392 = vmatprep.subr.mxu0 0.0
    %393 = vmatpush1.msra.mxu0 0.0
    %394 = vmatprep.subr.mxu0 0.0
    %395 = vmatpush1.msra.mxu0 0.0
    %396 = vmatprep.subr.mxu0 0.0
    %397 = vmatpush1.msra.mxu0 0.0
    %398 = vmatprep.subr.mxu0 0.0
    %399 = vmatpush1.msra.mxu0 0.0
    %400 = vmatprep.subr.mxu0 0.0
    %401 = vmatpush1.msra.mxu0 0.0
    %402 = vmatprep.subr.mxu0 0.0
    %403 = vmatpush1.msra.mxu0 0.0
    %404 = vmatprep.subr.mxu0 0.0
    %405 = vmatpush1.msra.mxu0 0.0
    %406 = vmatprep.subr.mxu0 0.0
    %407 = vmatpush1.msra.mxu0 0.0
    %408 = vmatprep.mubr.f32.mxu0 0.0
    %409 = vmatmul.mubr.f32.gmra.mrb[0].mxu0 %v321
    %v410 = vpop.f32.mrb[0].mxu0
    %v411 = vadd.f32 %v282, %v410
    %v412 = vpop.f32.mrb[0].mxu0
    %413 = vmatprep.mubr.f32.mxu0 0.0
    %414 = vmatmul.mubr.f32.gmra.mrb[0].mxu0 %v324
    %v415 = vpop.f32.mrb[0].mxu0
    %v416 = vadd.f32 %v287, %v415
    %v417 = vpop.f32.mrb[0].mxu0
    %418 = vmatprep.mubr.f32.mxu0 0.0
    %419 = vmatmul.mubr.f32.gmra.mrb[0].mxu0 %v327
    %v420 = vpop.f32.mrb[0].mxu0
    %v421 = vadd.f32 %v292, %v420
    %v422 = vpop.f32.mrb[0].mxu0
    %423 = vmatprep.mubr.f32.mxu0 0.0
    %424 = vmatmul.mubr.f32.gmra.mrb[0].mxu0 %v330
    %v425 = vpop.f32.mrb[0].mxu0
    %v426 = vadd.f32 %v297, %v425
    %v427 = vpop.f32.mrb[0].mxu0
    %428 = vmatprep.mubr.f32.mxu0 0.0
    %429 = vmatmul.mubr.f32.gmra.mrb[0].mxu0 %v333
    %v430 = vpop.f32.mrb[0].mxu0
    %v431 = vadd.f32 %v302, %v430
    %v432 = vpop.f32.mrb[0].mxu0
    %433 = vmatprep.mubr.f32.mxu0 0.0
    %434 = vmatmul.mubr.f32.gmra.mrb[0].mxu0 %v336
    %v435 = vpop.f32.mrb[0].mxu0
    %v436 = vadd.f32 %v307, %v435
    %v437 = vpop.f32.mrb[0].mxu0
    %438 = vmatprep.mubr.f32.mxu0 0.0
    %439 = vmatmul.mubr.f32.gmra.mrb[0].mxu0 %v339
    %v440 = vpop.f32.mrb[0].mxu0
    %v441 = vadd.f32 %v312, %v440
    %v442 = vpop.f32.mrb[0].mxu0
    %443 = vmatprep.mubr.f32.mxu0 0.0
    %444 = vmatmul.mubr.f32.gmra.mrb[0].mxu0 %v342
    %v445 = vpop.f32.mrb[0].mxu0
    %v446 = vadd.f32 %v317, %v445
    %v447 = vpop.f32.mrb[0].mxu0
    %448 = vdwg.mxu0
    %v449 = vrot.slane %v24, 5
    %v450 = vrot.slane %v25, 5
    %v451 = vrot.slane %v26, 5
    %v452 = vrot.slane %v27, 5
    %v453 = vrot.slane %v28, 5
    %v454 = vrot.slane %v29, 5
    %v455 = vrot.slane %v30, 5
    %v456 = vrot.slane %v31, 5
    %vm457 = vcmp.lt.s32.totalorder %v69, 3
    %v458 = vsel %vm457, %v455, %v456
    %v459 = vsel %vm457, %v454, %v455
    %v460 = vsel %vm457, %v453, %v454
    %v461 = vsel %vm457, %v452, %v453
    %v462 = vsel %vm457, %v451, %v452
    %v463 = vsel %vm457, %v450, %v451
    %v464 = vsel %vm457, %v449, %v450
    %v465 = vsel %vm457, %v456, %v449
    %v466 = vadd.s32 %v83, 4294967293
    %v467 = vadd.s32 %v90, 4294967293
    %v468 = vadd.s32 %v97, 4294967293
    %v469 = vadd.s32 %v104, 4294967293
    %v470 = vadd.s32 %v111, 4294967293
    %v471 = vadd.s32 %v118, 4294967293
    %v472 = vadd.s32 %v125, 4294967293
    %v473 = vadd.s32 %v132, 4294967293
    %vm474 = vcmp.ge.s32.totalorder %v466, 0
    %vm475 = vcmp.ge.s32.totalorder %v467, 0
    %vm476 = vcmp.ge.s32.totalorder %v468, 0
    %vm477 = vcmp.ge.s32.totalorder %v469, 0
    %vm478 = vcmp.ge.s32.totalorder %v470, 0
    %vm479 = vcmp.ge.s32.totalorder %v471, 0
    %vm480 = vcmp.ge.s32.totalorder %v472, 0
    %vm481 = vcmp.ge.s32.totalorder %v473, 0
    %vm482 = vcmp.lt.s32.totalorder %v466, 16
    %vm483 = vcmp.lt.s32.totalorder %v467, 16
    %vm484 = vcmp.lt.s32.totalorder %v468, 16
    %vm485 = vcmp.lt.s32.totalorder %v469, 16
    %vm486 = vcmp.lt.s32.totalorder %v470, 16
    %vm487 = vcmp.lt.s32.totalorder %v471, 16
    %vm488 = vcmp.lt.s32.totalorder %v472, 16
    %vm489 = vcmp.lt.s32.totalorder %v473, 16
    %vm490 = vmand %vm474, %vm482
    %vm491 = vmand %vm475, %vm483
    %vm492 = vmand %vm476, %vm484
    %vm493 = vmand %vm477, %vm485
    %vm494 = vmand %vm478, %vm486
    %vm495 = vmand %vm479, %vm487
    %vm496 = vmand %vm480, %vm488
    %vm497 = vmand %vm481, %vm489
    %v498 = vsel %vm490, %v465, 0.0
    %v499 = vsel %vm491, %v464, 0.0
    %v500 = vsel %vm492, %v463, 0.0
    %v501 = vsel %vm493, %v462, 0.0
    %v502 = vsel %vm494, %v461, 0.0
    %v503 = vsel %vm495, %v460, 0.0
    %v504 = vsel %vm496, %v459, 0.0
    %v505 = vsel %vm497, %v458, 0.0
    %v507 = vsel %vm190, %v498, 0
    %v510 = vsel %vm190, %v499, 0
    %v513 = vsel %vm190, %v500, 0
    %v516 = vsel %vm190, %v501, 0
    %v519 = vsel %vm190, %v502, 0
    %v522 = vsel %vm190, %v503, 0
    %v525 = vsel %vm190, %v504, 0
    %v528 = vsel %vm190, %v505, 0
    %530 = vmatprep.subr.mxu0 0.0
    %531 = vmatpush1.msra.mxu0 %v36
    %532 = vmatprep.subr.mxu0 0.0
    %533 = vmatpush1.msra.mxu0 %v37
    %534 = vmatprep.subr.mxu0 0.0
    %535 = vmatpush1.msra.mxu0 %v38
    %536 = vmatprep.subr.mxu0 0.0
    %537 = vmatpush1.msra.mxu0 %v39
    %538 = vmatprep.subr.mxu0 0.0
    %539 = vmatpush1.msra.mxu0 0.0
    %540 = vmatprep.subr.mxu0 0.0
    %541 = vmatpush1.msra.mxu0 0.0
    %542 = vmatprep.subr.mxu0 0.0
    %543 = vmatpush1.msra.mxu0 0.0
    %544 = vmatprep.subr.mxu0 0.0
    %545 = vmatpush1.msra.mxu0 0.0
    %546 = vmatprep.subr.mxu0 0.0
    %547 = vmatpush1.msra.mxu0 0.0
    %548 = vmatprep.subr.mxu0 0.0
    %549 = vmatpush1.msra.mxu0 0.0
    %550 = vmatprep.subr.mxu0 0.0
    %551 = vmatpush1.msra.mxu0 0.0
    %552 = vmatprep.subr.mxu0 0.0
    %553 = vmatpush1.msra.mxu0 0.0
    %554 = vmatprep.subr.mxu0 0.0
    %555 = vmatpush1.msra.mxu0 0.0
    %556 = vmatprep.subr.mxu0 0.0
    %557 = vmatpush1.msra.mxu0 0.0
    %558 = vmatprep.subr.mxu0 0.0
    %559 = vmatpush1.msra.mxu0 0.0
    %560 = vmatprep.subr.mxu0 0.0
    %561 = vmatpush1.msra.mxu0 0.0
    %562 = vmatprep.subr.mxu0 0.0
    %563 = vmatpush1.msra.mxu0 0.0
    %564 = vmatprep.subr.mxu0 0.0
    %565 = vmatpush1.msra.mxu0 0.0
    %566 = vmatprep.subr.mxu0 0.0
    %567 = vmatpush1.msra.mxu0 0.0
    %568 = vmatprep.subr.mxu0 0.0
    %569 = vmatpush1.msra.mxu0 0.0
    %570 = vmatprep.subr.mxu0 0.0
    %571 = vmatpush1.msra.mxu0 0.0
    %572 = vmatprep.subr.mxu0 0.0
    %573 = vmatpush1.msra.mxu0 0.0
    %574 = vmatprep.subr.mxu0 0.0
    %575 = vmatpush1.msra.mxu0 0.0
    %576 = vmatprep.subr.mxu0 0.0
    %577 = vmatpush1.msra.mxu0 0.0
    %578 = vmatprep.subr.mxu0 0.0
    %579 = vmatpush1.msra.mxu0 0.0
    %580 = vmatprep.subr.mxu0 0.0
    %581 = vmatpush1.msra.mxu0 0.0
    %582 = vmatprep.subr.mxu0 0.0
    %583 = vmatpush1.msra.mxu0 0.0
    %584 = vmatprep.subr.mxu0 0.0
    %585 = vmatpush1.msra.mxu0 0.0
    %586 = vmatprep.subr.mxu0 0.0
    %587 = vmatpush1.msra.mxu0 0.0
    %588 = vmatprep.subr.mxu0 0.0
    %589 = vmatpush1.msra.mxu0 0.0
    %590 = vmatprep.subr.mxu0 0.0
    %591 = vmatpush1.msra.mxu0 0.0
    %592 = vmatprep.subr.mxu0 0.0
    %593 = vmatpush1.msra.mxu0 0.0
    %594 = vmatprep.mubr.f32.mxu0 0.0
    %595 = vmatmul.mubr.f32.gmra.mrb[0].mxu0 %v507
    %v596 = vpop.f32.mrb[0].mxu0
    %v597 = vadd.f32 0.0, %v596
    %v598 = vpop.f32.mrb[0].mxu0
    %599 = vmatprep.mubr.f32.mxu0 0.0
    %600 = vmatmul.mubr.f32.gmra.mrb[0].mxu0 %v510
    %v601 = vpop.f32.mrb[0].mxu0
    %v602 = vadd.f32 0.0, %v601
    %v603 = vpop.f32.mrb[0].mxu0
    %604 = vmatprep.mubr.f32.mxu0 0.0
    %605 = vmatmul.mubr.f32.gmra.mrb[0].mxu0 %v513
    %v606 = vpop.f32.mrb[0].mxu0
    %v607 = vadd.f32 0.0, %v606
    %v608 = vpop.f32.mrb[0].mxu0
    %609 = vmatprep.mubr.f32.mxu0 0.0
    %610 = vmatmul.mubr.f32.gmra.mrb[0].mxu0 %v516
    %v611 = vpop.f32.mrb[0].mxu0
    %v612 = vadd.f32 0.0, %v611
    %v613 = vpop.f32.mrb[0].mxu0
    %614 = vmatprep.mubr.f32.mxu0 0.0
    %615 = vmatmul.mubr.f32.gmra.mrb[0].mxu0 %v519
    %v616 = vpop.f32.mrb[0].mxu0
    %v617 = vadd.f32 0.0, %v616
    %v618 = vpop.f32.mrb[0].mxu0
    %619 = vmatprep.mubr.f32.mxu0 0.0
    %620 = vmatmul.mubr.f32.gmra.mrb[0].mxu0 %v522
    %v621 = vpop.f32.mrb[0].mxu0
    %v622 = vadd.f32 0.0, %v621
    %v623 = vpop.f32.mrb[0].mxu0
    %624 = vmatprep.mubr.f32.mxu0 0.0
    %625 = vmatmul.mubr.f32.gmra.mrb[0].mxu0 %v525
    %v626 = vpop.f32.mrb[0].mxu0
    %v627 = vadd.f32 0.0, %v626
    %v628 = vpop.f32.mrb[0].mxu0
    %629 = vmatprep.mubr.f32.mxu0 0.0
    %630 = vmatmul.mubr.f32.gmra.mrb[0].mxu0 %v528
    %v631 = vpop.f32.mrb[0].mxu0
    %v632 = vadd.f32 0.0, %v631
    %v633 = vpop.f32.mrb[0].mxu0
    %634 = vdwg.mxu0
    %v635 = vadd.f32 %v411, %v597
    %v636 = vadd.f32 %v416, %v602
    %v637 = vadd.f32 %v421, %v607
    %v638 = vadd.f32 %v426, %v612
    %v639 = vadd.f32 %v431, %v617
    %v640 = vadd.f32 %v436, %v622
    %v641 = vadd.f32 %v441, %v627
    %v642 = vadd.f32 %v446, %v632
    %v643 = vrot.slane %v24, 6
    %v644 = vrot.slane %v25, 6
    %v645 = vrot.slane %v26, 6
    %v646 = vrot.slane %v27, 6
    %v647 = vrot.slane %v28, 6
    %v648 = vrot.slane %v29, 6
    %v649 = vrot.slane %v30, 6
    %v650 = vrot.slane %v31, 6
    %vm651 = vcmp.lt.s32.totalorder %v69, 2
    %v652 = vsel %vm651, %v649, %v650
    %v653 = vsel %vm651, %v648, %v649
    %v654 = vsel %vm651, %v647, %v648
    %v655 = vsel %vm651, %v646, %v647
    %v656 = vsel %vm651, %v645, %v646
    %v657 = vsel %vm651, %v644, %v645
    %v658 = vsel %vm651, %v643, %v644
    %v659 = vsel %vm651, %v650, %v643
    %v660 = vadd.s32 %v83, 4294967294
    %v661 = vadd.s32 %v90, 4294967294
    %v662 = vadd.s32 %v97, 4294967294
    %v663 = vadd.s32 %v104, 4294967294
    %v664 = vadd.s32 %v111, 4294967294
    %v665 = vadd.s32 %v118, 4294967294
    %v666 = vadd.s32 %v125, 4294967294
    %v667 = vadd.s32 %v132, 4294967294
    %vm668 = vcmp.ge.s32.totalorder %v660, 0
    %vm669 = vcmp.ge.s32.totalorder %v661, 0
    %vm670 = vcmp.ge.s32.totalorder %v662, 0
    %vm671 = vcmp.ge.s32.totalorder %v663, 0
    %vm672 = vcmp.ge.s32.totalorder %v664, 0
    %vm673 = vcmp.ge.s32.totalorder %v665, 0
    %vm674 = vcmp.ge.s32.totalorder %v666, 0
    %vm675 = vcmp.ge.s32.totalorder %v667, 0
    %vm676 = vcmp.lt.s32.totalorder %v660, 16
    %vm677 = vcmp.lt.s32.totalorder %v661, 16
    %vm678 = vcmp.lt.s32.totalorder %v662, 16
    %vm679 = vcmp.lt.s32.totalorder %v663, 16
    %vm680 = vcmp.lt.s32.totalorder %v664, 16
    %vm681 = vcmp.lt.s32.totalorder %v665, 16
    %vm682 = vcmp.lt.s32.totalorder %v666, 16
    %vm683 = vcmp.lt.s32.totalorder %v667, 16
    %vm684 = vmand %vm668, %vm676
    %vm685 = vmand %vm669, %vm677
    %vm686 = vmand %vm670, %vm678
    %vm687 = vmand %vm671, %vm679
    %vm688 = vmand %vm672, %vm680
    %vm689 = vmand %vm673, %vm681
    %vm690 = vmand %vm674, %vm682
    %vm691 = vmand %vm675, %vm683
    %v692 = vsel %vm684, %v659, 0.0
    %v693 = vsel %vm685, %v658, 0.0
    %v694 = vsel %vm686, %v657, 0.0
    %v695 = vsel %vm687, %v656, 0.0
    %v696 = vsel %vm688, %v655, 0.0
    %v697 = vsel %vm689, %v654, 0.0
    %v698 = vsel %vm690, %v653, 0.0
    %v699 = vsel %vm691, %v652, 0.0
    %v701 = vsel %vm190, %v692, 0
    %v704 = vsel %vm190, %v693, 0
    %v707 = vsel %vm190, %v694, 0
    %v710 = vsel %vm190, %v695, 0
    %v713 = vsel %vm190, %v696, 0
    %v716 = vsel %vm190, %v697, 0
    %v719 = vsel %vm190, %v698, 0
    %v722 = vsel %vm190, %v699, 0
    %724 = vmatprep.subr.mxu0 0.0
    %725 = vmatpush1.msra.mxu0 %v40
    %726 = vmatprep.subr.mxu0 0.0
    %727 = vmatpush1.msra.mxu0 %v41
    %728 = vmatprep.subr.mxu0 0.0
    %729 = vmatpush1.msra.mxu0 %v42
    %730 = vmatprep.subr.mxu0 0.0
    %731 = vmatpush1.msra.mxu0 %v43
    %732 = vmatprep.subr.mxu0 0.0
    %733 = vmatpush1.msra.mxu0 0.0
    %734 = vmatprep.subr.mxu0 0.0
    %735 = vmatpush1.msra.mxu0 0.0
    %736 = vmatprep.subr.mxu0 0.0
    %737 = vmatpush1.msra.mxu0 0.0
    %738 = vmatprep.subr.mxu0 0.0
    %739 = vmatpush1.msra.mxu0 0.0
    %740 = vmatprep.subr.mxu0 0.0
    %741 = vmatpush1.msra.mxu0 0.0
    %742 = vmatprep.subr.mxu0 0.0
    %743 = vmatpush1.msra.mxu0 0.0
    %744 = vmatprep.subr.mxu0 0.0
    %745 = vmatpush1.msra.mxu0 0.0
    %746 = vmatprep.subr.mxu0 0.0
    %747 = vmatpush1.msra.mxu0 0.0
    %748 = vmatprep.subr.mxu0 0.0
    %749 = vmatpush1.msra.mxu0 0.0
    %750 = vmatprep.subr.mxu0 0.0
    %751 = vmatpush1.msra.mxu0 0.0
    %752 = vmatprep.subr.mxu0 0.0
    %753 = vmatpush1.msra.mxu0 0.0
    %754 = vmatprep.subr.mxu0 0.0
    %755 = vmatpush1.msra.mxu0 0.0
    %756 = vmatprep.subr.mxu0 0.0
    %757 = vmatpush1.msra.mxu0 0.0
    %758 = vmatprep.subr.mxu0 0.0
    %759 = vmatpush1.msra.mxu0 0.0
    %760 = vmatprep.subr.mxu0 0.0
    %761 = vmatpush1.msra.mxu0 0.0
    %762 = vmatprep.subr.mxu0 0.0
    %763 = vmatpush1.msra.mxu0 0.0
    %764 = vmatprep.subr.mxu0 0.0
    %765 = vmatpush1.msra.mxu0 0.0
    %766 = vmatprep.subr.mxu0 0.0
    %767 = vmatpush1.msra.mxu0 0.0
    %768 = vmatprep.subr.mxu0 0.0
    %769 = vmatpush1.msra.mxu0 0.0
    %770 = vmatprep.subr.mxu0 0.0
    %771 = vmatpush1.msra.mxu0 0.0
    %772 = vmatprep.subr.mxu0 0.0
    %773 = vmatpush1.msra.mxu0 0.0
    %774 = vmatprep.subr.mxu0 0.0
    %775 = vmatpush1.msra.mxu0 0.0
    %776 = vmatprep.subr.mxu0 0.0
    %777 = vmatpush1.msra.mxu0 0.0
    %778 = vmatprep.subr.mxu0 0.0
    %779 = vmatpush1.msra.mxu0 0.0
    %780 = vmatprep.subr.mxu0 0.0
    %781 = vmatpush1.msra.mxu0 0.0
    %782 = vmatprep.subr.mxu0 0.0
    %783 = vmatpush1.msra.mxu0 0.0
    %784 = vmatprep.subr.mxu0 0.0
    %785 = vmatpush1.msra.mxu0 0.0
    %786 = vmatprep.subr.mxu0 0.0
    %787 = vmatpush1.msra.mxu0 0.0
    %788 = vmatprep.mubr.f32.mxu0 0.0
    %789 = vmatmul.mubr.f32.gmra.mrb[0].mxu0 %v701
    %v790 = vpop.f32.mrb[0].mxu0
    %v791 = vadd.f32 0.0, %v790
    %v792 = vpop.f32.mrb[0].mxu0
    %793 = vmatprep.mubr.f32.mxu0 0.0
    %794 = vmatmul.mubr.f32.gmra.mrb[0].mxu0 %v704
    %v795 = vpop.f32.mrb[0].mxu0
    %v796 = vadd.f32 0.0, %v795
    %v797 = vpop.f32.mrb[0].mxu0
    %798 = vmatprep.mubr.f32.mxu0 0.0
    %799 = vmatmul.mubr.f32.gmra.mrb[0].mxu0 %v707
    %v800 = vpop.f32.mrb[0].mxu0
    %v801 = vadd.f32 0.0, %v800
    %v802 = vpop.f32.mrb[0].mxu0
    %803 = vmatprep.mubr.f32.mxu0 0.0
    %804 = vmatmul.mubr.f32.gmra.mrb[0].mxu0 %v710
    %v805 = vpop.f32.mrb[0].mxu0
    %v806 = vadd.f32 0.0, %v805
    %v807 = vpop.f32.mrb[0].mxu0
    %808 = vmatprep.mubr.f32.mxu0 0.0
    %809 = vmatmul.mubr.f32.gmra.mrb[0].mxu0 %v713
    %v810 = vpop.f32.mrb[0].mxu0
    %v811 = vadd.f32 0.0, %v810
    %v812 = vpop.f32.mrb[0].mxu0
    %813 = vmatprep.mubr.f32.mxu0 0.0
    %814 = vmatmul.mubr.f32.gmra.mrb[0].mxu0 %v716
    %v815 = vpop.f32.mrb[0].mxu0
    %v816 = vadd.f32 0.0, %v815
    %v817 = vpop.f32.mrb[0].mxu0
    %818 = vmatprep.mubr.f32.mxu0 0.0
    %819 = vmatmul.mubr.f32.gmra.mrb[0].mxu0 %v719
    %v820 = vpop.f32.mrb[0].mxu0
    %v821 = vadd.f32 0.0, %v820
    %v822 = vpop.f32.mrb[0].mxu0
    %823 = vmatprep.mubr.f32.mxu0 0.0
    %824 = vmatmul.mubr.f32.gmra.mrb[0].mxu0 %v722
    %v825 = vpop.f32.mrb[0].mxu0
    %v826 = vadd.f32 0.0, %v825
    %v827 = vpop.f32.mrb[0].mxu0
    %828 = vdwg.mxu0
    %v829 = vadd.f32 %v635, %v791
    %v830 = vadd.f32 %v636, %v796
    %v831 = vadd.f32 %v637, %v801
    %v832 = vadd.f32 %v638, %v806
    %v833 = vadd.f32 %v639, %v811
    %v834 = vadd.f32 %v640, %v816
    %v835 = vadd.f32 %v641, %v821
    %v836 = vadd.f32 %v642, %v826
    %v837 = vrot.slane %v24, 7
    %v838 = vrot.slane %v25, 7
    %v839 = vrot.slane %v26, 7
    %v840 = vrot.slane %v27, 7
    %v841 = vrot.slane %v28, 7
    %v842 = vrot.slane %v29, 7
    %v843 = vrot.slane %v30, 7
    %v844 = vrot.slane %v31, 7
    %vm845 = vcmp.lt.s32.totalorder %v69, 1
    %v846 = vsel %vm845, %v843, %v844
    %v847 = vsel %vm845, %v842, %v843
    %v848 = vsel %vm845, %v841, %v842
    %v849 = vsel %vm845, %v840, %v841
    %v850 = vsel %vm845, %v839, %v840
    %v851 = vsel %vm845, %v838, %v839
    %v852 = vsel %vm845, %v837, %v838
    %v853 = vsel %vm845, %v844, %v837
    %v854 = vadd.s32 %v83, 4294967295
    %v855 = vadd.s32 %v90, 4294967295
    %v856 = vadd.s32 %v97, 4294967295
    %v857 = vadd.s32 %v104, 4294967295
    %v858 = vadd.s32 %v111, 4294967295
    %v859 = vadd.s32 %v118, 4294967295
    %v860 = vadd.s32 %v125, 4294967295
    %v861 = vadd.s32 %v132, 4294967295
    %vm862 = vcmp.ge.s32.totalorder %v854, 0
    %vm863 = vcmp.ge.s32.totalorder %v855, 0
    %vm864 = vcmp.ge.s32.totalorder %v856, 0
    %vm865 = vcmp.ge.s32.totalorder %v857, 0
    %vm866 = vcmp.ge.s32.totalorder %v858, 0
    %vm867 = vcmp.ge.s32.totalorder %v859, 0
    %vm868 = vcmp.ge.s32.totalorder %v860, 0
    %vm869 = vcmp.ge.s32.totalorder %v861, 0
    %vm870 = vcmp.lt.s32.totalorder %v854, 16
    %vm871 = vcmp.lt.s32.totalorder %v855, 16
    %vm872 = vcmp.lt.s32.totalorder %v856, 16
    %vm873 = vcmp.lt.s32.totalorder %v857, 16
    %vm874 = vcmp.lt.s32.totalorder %v858, 16
    %vm875 = vcmp.lt.s32.totalorder %v859, 16
    %vm876 = vcmp.lt.s32.totalorder %v860, 16
    %vm877 = vcmp.lt.s32.totalorder %v861, 16
    %vm878 = vmand %vm862, %vm870
    %vm879 = vmand %vm863, %vm871
    %vm880 = vmand %vm864, %vm872
    %vm881 = vmand %vm865, %vm873
    %vm882 = vmand %vm866, %vm874
    %vm883 = vmand %vm867, %vm875
    %vm884 = vmand %vm868, %vm876
    %vm885 = vmand %vm869, %vm877
    %v886 = vsel %vm878, %v853, 0.0
    %v887 = vsel %vm879, %v852, 0.0
    %v888 = vsel %vm880, %v851, 0.0
    %v889 = vsel %vm881, %v850, 0.0
    %v890 = vsel %vm882, %v849, 0.0
    %v891 = vsel %vm883, %v848, 0.0
    %v892 = vsel %vm884, %v847, 0.0
    %v893 = vsel %vm885, %v846, 0.0
    %v895 = vsel %vm190, %v886, 0
    %v898 = vsel %vm190, %v887, 0
    %v901 = vsel %vm190, %v888, 0
    %v904 = vsel %vm190, %v889, 0
    %v907 = vsel %vm190, %v890, 0
    %v910 = vsel %vm190, %v891, 0
    %v913 = vsel %vm190, %v892, 0
    %v916 = vsel %vm190, %v893, 0
    %918 = vmatprep.subr.mxu0 0.0
    %919 = vmatpush1.msra.mxu0 %v44
    %920 = vmatprep.subr.mxu0 0.0
    %921 = vmatpush1.msra.mxu0 %v45
    %922 = vmatprep.subr.mxu0 0.0
    %923 = vmatpush1.msra.mxu0 %v46
    %924 = vmatprep.subr.mxu0 0.0
    %925 = vmatpush1.msra.mxu0 %v47
    %926 = vmatprep.subr.mxu0 0.0
    %927 = vmatpush1.msra.mxu0 0.0
    %928 = vmatprep.subr.mxu0 0.0
    %929 = vmatpush1.msra.mxu0 0.0
    %930 = vmatprep.subr.mxu0 0.0
    %931 = vmatpush1.msra.mxu0 0.0
    %932 = vmatprep.subr.mxu0 0.0
    %933 = vmatpush1.msra.mxu0 0.0
    %934 = vmatprep.subr.mxu0 0.0
    %935 = vmatpush1.msra.mxu0 0.0
    %936 = vmatprep.subr.mxu0 0.0
    %937 = vmatpush1.msra.mxu0 0.0
    %938 = vmatprep.subr.mxu0 0.0
    %939 = vmatpush1.msra.mxu0 0.0
    %940 = vmatprep.subr.mxu0 0.0
    %941 = vmatpush1.msra.mxu0 0.0
    %942 = vmatprep.subr.mxu0 0.0
    %943 = vmatpush1.msra.mxu0 0.0
    %944 = vmatprep.subr.mxu0 0.0
    %945 = vmatpush1.msra.mxu0 0.0
    %946 = vmatprep.subr.mxu0 0.0
    %947 = vmatpush1.msra.mxu0 0.0
    %948 = vmatprep.subr.mxu0 0.0
    %949 = vmatpush1.msra.mxu0 0.0
    %950 = vmatprep.subr.mxu0 0.0
    %951 = vmatpush1.msra.mxu0 0.0
    %952 = vmatprep.subr.mxu0 0.0
    %953 = vmatpush1.msra.mxu0 0.0
    %954 = vmatprep.subr.mxu0 0.0
    %955 = vmatpush1.msra.mxu0 0.0
    %956 = vmatprep.subr.mxu0 0.0
    %957 = vmatpush1.msra.mxu0 0.0
    %958 = vmatprep.subr.mxu0 0.0
    %959 = vmatpush1.msra.mxu0 0.0
    %960 = vmatprep.subr.mxu0 0.0
    %961 = vmatpush1.msra.mxu0 0.0
    %962 = vmatprep.subr.mxu0 0.0
    %963 = vmatpush1.msra.mxu0 0.0
    %964 = vmatprep.subr.mxu0 0.0
    %965 = vmatpush1.msra.mxu0 0.0
    %966 = vmatprep.subr.mxu0 0.0
    %967 = vmatpush1.msra.mxu0 0.0
    %968 = vmatprep.subr.mxu0 0.0
    %969 = vmatpush1.msra.mxu0 0.0
    %970 = vmatprep.subr.mxu0 0.0
    %971 = vmatpush1.msra.mxu0 0.0
    %972 = vmatprep.subr.mxu0 0.0
    %973 = vmatpush1.msra.mxu0 0.0
    %974 = vmatprep.subr.mxu0 0.0
    %975 = vmatpush1.msra.mxu0 0.0
    %976 = vmatprep.subr.mxu0 0.0
    %977 = vmatpush1.msra.mxu0 0.0
    %978 = vmatprep.subr.mxu0 0.0
    %979 = vmatpush1.msra.mxu0 0.0
    %980 = vmatprep.subr.mxu0 0.0
    %981 = vmatpush1.msra.mxu0 0.0
    %982 = vmatprep.mubr.f32.mxu0 0.0
    %983 = vmatmul.mubr.f32.gmra.mrb[0].mxu0 %v895
    %v984 = vpop.f32.mrb[0].mxu0
    %v985 = vadd.f32 0.0, %v984
    %v986 = vpop.f32.mrb[0].mxu0
    %987 = vmatprep.mubr.f32.mxu0 0.0
    %988 = vmatmul.mubr.f32.gmra.mrb[0].mxu0 %v898
    %v989 = vpop.f32.mrb[0].mxu0
    %v990 = vadd.f32 0.0, %v989
    %v991 = vpop.f32.mrb[0].mxu0
    %992 = vmatprep.mubr.f32.mxu0 0.0
    %993 = vmatmul.mubr.f32.gmra.mrb[0].mxu0 %v901
    %v994 = vpop.f32.mrb[0].mxu0
    %v995 = vadd.f32 0.0, %v994
    %v996 = vpop.f32.mrb[0].mxu0
    %997 = vmatprep.mubr.f32.mxu0 0.0
    %998 = vmatmul.mubr.f32.gmra.mrb[0].mxu0 %v904
    %v999 = vpop.f32.mrb[0].mxu0
    %v1000 = vadd.f32 0.0, %v999
    %v1001 = vpop.f32.mrb[0].mxu0
    %1002 = vmatprep.mubr.f32.mxu0 0.0
    %1003 = vmatmul.mubr.f32.gmra.mrb[0].mxu0 %v907
    %v1004 = vpop.f32.mrb[0].mxu0
    %v1005 = vadd.f32 0.0, %v1004
    %v1006 = vpop.f32.mrb[0].mxu0
    %1007 = vmatprep.mubr.f32.mxu0 0.0
    %1008 = vmatmul.mubr.f32.gmra.mrb[0].mxu0 %v910
    %v1009 = vpop.f32.mrb[0].mxu0
    %v1010 = vadd.f32 0.0, %v1009
    %v1011 = vpop.f32.mrb[0].mxu0
    %1012 = vmatprep.mubr.f32.mxu0 0.0
    %1013 = vmatmul.mubr.f32.gmra.mrb[0].mxu0 %v913
    %v1014 = vpop.f32.mrb[0].mxu0
    %v1015 = vadd.f32 0.0, %v1014
    %v1016 = vpop.f32.mrb[0].mxu0
    %1017 = vmatprep.mubr.f32.mxu0 0.0
    %1018 = vmatmul.mubr.f32.gmra.mrb[0].mxu0 %v916
    %v1019 = vpop.f32.mrb[0].mxu0
    %v1020 = vadd.f32 0.0, %v1019
    %v1021 = vpop.f32.mrb[0].mxu0
    %1022 = vdwg.mxu0
    %v1023 = vadd.f32 %v829, %v985
    %v1024 = vadd.f32 %v830, %v990
    %v1025 = vadd.f32 %v831, %v995
    %v1026 = vadd.f32 %v832, %v1000
    %v1027 = vadd.f32 %v833, %v1005
    %v1028 = vadd.f32 %v834, %v1010
    %v1029 = vadd.f32 %v835, %v1015
    %v1030 = vadd.f32 %v836, %v1020
    %v1031 = vrot.slane %v24, 1
    %v1032 = vrot.slane %v25, 1
    %v1033 = vrot.slane %v26, 1
    %v1034 = vrot.slane %v27, 1
    %v1035 = vrot.slane %v28, 1
    %v1036 = vrot.slane %v29, 1
    %v1037 = vrot.slane %v30, 1
    %v1038 = vrot.slane %v31, 1
    %vm1039 = vcmp.lt.s32.totalorder %v69, 7
    %v1040 = vsel %vm1039, %v1037, %v1038
    %v1041 = vsel %vm1039, %v1036, %v1037
    %v1042 = vsel %vm1039, %v1035, %v1036
    %v1043 = vsel %vm1039, %v1034, %v1035
    %v1044 = vsel %vm1039, %v1033, %v1034
    %v1045 = vsel %vm1039, %v1032, %v1033
    %v1046 = vsel %vm1039, %v1031, %v1032
    %v1047 = vsel %vm1039, %v1038, %v1031
    %v1048 = vadd.s32 %v83, 1
    %v1049 = vadd.s32 %v90, 1
    %v1050 = vadd.s32 %v97, 1
    %v1051 = vadd.s32 %v104, 1
    %v1052 = vadd.s32 %v111, 1
    %v1053 = vadd.s32 %v118, 1
    %v1054 = vadd.s32 %v125, 1
    %v1055 = vadd.s32 %v132, 1
    %vm1056 = vcmp.ge.s32.totalorder %v1048, 0
    %vm1057 = vcmp.ge.s32.totalorder %v1049, 0
    %vm1058 = vcmp.ge.s32.totalorder %v1050, 0
    %vm1059 = vcmp.ge.s32.totalorder %v1051, 0
    %vm1060 = vcmp.ge.s32.totalorder %v1052, 0
    %vm1061 = vcmp.ge.s32.totalorder %v1053, 0
    %vm1062 = vcmp.ge.s32.totalorder %v1054, 0
    %vm1063 = vcmp.ge.s32.totalorder %v1055, 0
    %vm1064 = vcmp.lt.s32.totalorder %v1048, 16
    %vm1065 = vcmp.lt.s32.totalorder %v1049, 16
    %vm1066 = vcmp.lt.s32.totalorder %v1050, 16
    %vm1067 = vcmp.lt.s32.totalorder %v1051, 16
    %vm1068 = vcmp.lt.s32.totalorder %v1052, 16
    %vm1069 = vcmp.lt.s32.totalorder %v1053, 16
    %vm1070 = vcmp.lt.s32.totalorder %v1054, 16
    %vm1071 = vcmp.lt.s32.totalorder %v1055, 16
    %vm1072 = vmand %vm1056, %vm1064
    %vm1073 = vmand %vm1057, %vm1065
    %vm1074 = vmand %vm1058, %vm1066
    %vm1075 = vmand %vm1059, %vm1067
    %vm1076 = vmand %vm1060, %vm1068
    %vm1077 = vmand %vm1061, %vm1069
    %vm1078 = vmand %vm1062, %vm1070
    %vm1079 = vmand %vm1063, %vm1071
    %v1080 = vsel %vm1072, %v1046, 0.0
    %v1081 = vsel %vm1073, %v1045, 0.0
    %v1082 = vsel %vm1074, %v1044, 0.0
    %v1083 = vsel %vm1075, %v1043, 0.0
    %v1084 = vsel %vm1076, %v1042, 0.0
    %v1085 = vsel %vm1077, %v1041, 0.0
    %v1086 = vsel %vm1078, %v1040, 0.0
    %v1087 = vsel %vm1079, %v1047, 0.0
    %v1089 = vsel %vm190, %v1080, 0
    %v1092 = vsel %vm190, %v1081, 0
    %v1095 = vsel %vm190, %v1082, 0
    %v1098 = vsel %vm190, %v1083, 0
    %v1101 = vsel %vm190, %v1084, 0
    %v1104 = vsel %vm190, %v1085, 0
    %v1107 = vsel %vm190, %v1086, 0
    %v1110 = vsel %vm190, %v1087, 0
    %1112 = vmatprep.subr.mxu0 0.0
    %1113 = vmatpush1.msra.mxu0 %v52
    %1114 = vmatprep.subr.mxu0 0.0
    %1115 = vmatpush1.msra.mxu0 %v53
    %1116 = vmatprep.subr.mxu0 0.0
    %1117 = vmatpush1.msra.mxu0 %v54
    %1118 = vmatprep.subr.mxu0 0.0
    %1119 = vmatpush1.msra.mxu0 %v55
    %1120 = vmatprep.subr.mxu0 0.0
    %1121 = vmatpush1.msra.mxu0 0.0
    %1122 = vmatprep.subr.mxu0 0.0
    %1123 = vmatpush1.msra.mxu0 0.0
    %1124 = vmatprep.subr.mxu0 0.0
    %1125 = vmatpush1.msra.mxu0 0.0
    %1126 = vmatprep.subr.mxu0 0.0
    %1127 = vmatpush1.msra.mxu0 0.0
    %1128 = vmatprep.subr.mxu0 0.0
    %1129 = vmatpush1.msra.mxu0 0.0
    %1130 = vmatprep.subr.mxu0 0.0
    %1131 = vmatpush1.msra.mxu0 0.0
    %1132 = vmatprep.subr.mxu0 0.0
    %1133 = vmatpush1.msra.mxu0 0.0
    %1134 = vmatprep.subr.mxu0 0.0
    %1135 = vmatpush1.msra.mxu0 0.0
    %1136 = vmatprep.subr.mxu0 0.0
    %1137 = vmatpush1.msra.mxu0 0.0
    %1138 = vmatprep.subr.mxu0 0.0
    %1139 = vmatpush1.msra.mxu0 0.0
    %1140 = vmatprep.subr.mxu0 0.0
    %1141 = vmatpush1.msra.mxu0 0.0
    %1142 = vmatprep.subr.mxu0 0.0
    %1143 = vmatpush1.msra.mxu0 0.0
    %1144 = vmatprep.subr.mxu0 0.0
    %1145 = vmatpush1.msra.mxu0 0.0
    %1146 = vmatprep.subr.mxu0 0.0
    %1147 = vmatpush1.msra.mxu0 0.0
    %1148 = vmatprep.subr.mxu0 0.0
    %1149 = vmatpush1.msra.mxu0 0.0
    %1150 = vmatprep.subr.mxu0 0.0
    %1151 = vmatpush1.msra.mxu0 0.0
    %1152 = vmatprep.subr.mxu0 0.0
    %1153 = vmatpush1.msra.mxu0 0.0
    %1154 = vmatprep.subr.mxu0 0.0
    %1155 = vmatpush1.msra.mxu0 0.0
    %1156 = vmatprep.subr.mxu0 0.0
    %1157 = vmatpush1.msra.mxu0 0.0
    %1158 = vmatprep.subr.mxu0 0.0
    %1159 = vmatpush1.msra.mxu0 0.0
    %1160 = vmatprep.subr.mxu0 0.0
    %1161 = vmatpush1.msra.mxu0 0.0
    %1162 = vmatprep.subr.mxu0 0.0
    %1163 = vmatpush1.msra.mxu0 0.0
    %1164 = vmatprep.subr.mxu0 0.0
    %1165 = vmatpush1.msra.mxu0 0.0
    %1166 = vmatprep.subr.mxu0 0.0
    %1167 = vmatpush1.msra.mxu0 0.0
    %1168 = vmatprep.subr.mxu0 0.0
    %1169 = vmatpush1.msra.mxu0 0.0
    %1170 = vmatprep.subr.mxu0 0.0
    %1171 = vmatpush1.msra.mxu0 0.0
    %1172 = vmatprep.subr.mxu0 0.0
    %1173 = vmatpush1.msra.mxu0 0.0
    %1174 = vmatprep.subr.mxu0 0.0
    %1175 = vmatpush1.msra.mxu0 0.0
    %1176 = vmatprep.mubr.f32.mxu0 0.0
    %1177 = vmatmul.mubr.f32.gmra.mrb[0].mxu0 %v1089
    %v1178 = vpop.f32.mrb[0].mxu0
    %v1179 = vadd.f32 0.0, %v1178
    %v1180 = vpop.f32.mrb[0].mxu0
    %1181 = vmatprep.mubr.f32.mxu0 0.0
    %1182 = vmatmul.mubr.f32.gmra.mrb[0].mxu0 %v1092
    %v1183 = vpop.f32.mrb[0].mxu0
    %v1184 = vadd.f32 0.0, %v1183
    %v1185 = vpop.f32.mrb[0].mxu0
    %1186 = vmatprep.mubr.f32.mxu0 0.0
    %1187 = vmatmul.mubr.f32.gmra.mrb[0].mxu0 %v1095
    %v1188 = vpop.f32.mrb[0].mxu0
    %v1189 = vadd.f32 0.0, %v1188
    %v1190 = vpop.f32.mrb[0].mxu0
    %1191 = vmatprep.mubr.f32.mxu0 0.0
    %1192 = vmatmul.mubr.f32.gmra.mrb[0].mxu0 %v1098
    %v1193 = vpop.f32.mrb[0].mxu0
    %v1194 = vadd.f32 0.0, %v1193
    %v1195 = vpop.f32.mrb[0].mxu0
    %1196 = vmatprep.mubr.f32.mxu0 0.0
    %1197 = vmatmul.mubr.f32.gmra.mrb[0].mxu0 %v1101
    %v1198 = vpop.f32.mrb[0].mxu0
    %v1199 = vadd.f32 0.0, %v1198
    %v1200 = vpop.f32.mrb[0].mxu0
    %1201 = vmatprep.mubr.f32.mxu0 0.0
    %1202 = vmatmul.mubr.f32.gmra.mrb[0].mxu0 %v1104
    %v1203 = vpop.f32.mrb[0].mxu0
    %v1204 = vadd.f32 0.0, %v1203
    %v1205 = vpop.f32.mrb[0].mxu0
    %1206 = vmatprep.mubr.f32.mxu0 0.0
    %1207 = vmatmul.mubr.f32.gmra.mrb[0].mxu0 %v1107
    %v1208 = vpop.f32.mrb[0].mxu0
    %v1209 = vadd.f32 0.0, %v1208
    %v1210 = vpop.f32.mrb[0].mxu0
    %1211 = vmatprep.mubr.f32.mxu0 0.0
    %1212 = vmatmul.mubr.f32.gmra.mrb[0].mxu0 %v1110
    %v1213 = vpop.f32.mrb[0].mxu0
    %v1214 = vadd.f32 0.0, %v1213
    %v1215 = vpop.f32.mrb[0].mxu0
    %1216 = vdwg.mxu0
    %v1217 = vadd.f32 %v1023, %v1179
    %v1218 = vadd.f32 %v1024, %v1184
    %v1219 = vadd.f32 %v1025, %v1189
    %v1220 = vadd.f32 %v1026, %v1194
    %v1221 = vadd.f32 %v1027, %v1199
    %v1222 = vadd.f32 %v1028, %v1204
    %v1223 = vadd.f32 %v1029, %v1209
    %v1224 = vadd.f32 %v1030, %v1214
    %v1225 = vrot.slane %v24, 2
    %v1226 = vrot.slane %v25, 2
    %v1227 = vrot.slane %v26, 2
    %v1228 = vrot.slane %v27, 2
    %v1229 = vrot.slane %v28, 2
    %v1230 = vrot.slane %v29, 2
    %v1231 = vrot.slane %v30, 2
    %v1232 = vrot.slane %v31, 2
    %vm1233 = vcmp.lt.s32.totalorder %v69, 6
    %v1234 = vsel %vm1233, %v1231, %v1232
    %v1235 = vsel %vm1233, %v1230, %v1231
    %v1236 = vsel %vm1233, %v1229, %v1230
    %v1237 = vsel %vm1233, %v1228, %v1229
    %v1238 = vsel %vm1233, %v1227, %v1228
    %v1239 = vsel %vm1233, %v1226, %v1227
    %v1240 = vsel %vm1233, %v1225, %v1226
    %v1241 = vsel %vm1233, %v1232, %v1225
    %v1242 = vadd.s32 %v83, 2
    %v1243 = vadd.s32 %v90, 2
    %v1244 = vadd.s32 %v97, 2
    %v1245 = vadd.s32 %v104, 2
    %v1246 = vadd.s32 %v111, 2
    %v1247 = vadd.s32 %v118, 2
    %v1248 = vadd.s32 %v125, 2
    %v1249 = vadd.s32 %v132, 2
    %vm1250 = vcmp.ge.s32.totalorder %v1242, 0
    %vm1251 = vcmp.ge.s32.totalorder %v1243, 0
    %vm1252 = vcmp.ge.s32.totalorder %v1244, 0
    %vm1253 = vcmp.ge.s32.totalorder %v1245, 0
    %vm1254 = vcmp.ge.s32.totalorder %v1246, 0
    %vm1255 = vcmp.ge.s32.totalorder %v1247, 0
    %vm1256 = vcmp.ge.s32.totalorder %v1248, 0
    %vm1257 = vcmp.ge.s32.totalorder %v1249, 0
    %vm1258 = vcmp.lt.s32.totalorder %v1242, 16
    %vm1259 = vcmp.lt.s32.totalorder %v1243, 16
    %vm1260 = vcmp.lt.s32.totalorder %v1244, 16
    %vm1261 = vcmp.lt.s32.totalorder %v1245, 16
    %vm1262 = vcmp.lt.s32.totalorder %v1246, 16
    %vm1263 = vcmp.lt.s32.totalorder %v1247, 16
    %vm1264 = vcmp.lt.s32.totalorder %v1248, 16
    %vm1265 = vcmp.lt.s32.totalorder %v1249, 16
    %vm1266 = vmand %vm1250, %vm1258
    %vm1267 = vmand %vm1251, %vm1259
    %vm1268 = vmand %vm1252, %vm1260
    %vm1269 = vmand %vm1253, %vm1261
    %vm1270 = vmand %vm1254, %vm1262
    %vm1271 = vmand %vm1255, %vm1263
    %vm1272 = vmand %vm1256, %vm1264
    %vm1273 = vmand %vm1257, %vm1265
    %v1274 = vsel %vm1266, %v1240, 0.0
    %v1275 = vsel %vm1267, %v1239, 0.0
    %v1276 = vsel %vm1268, %v1238, 0.0
    %v1277 = vsel %vm1269, %v1237, 0.0
    %v1278 = vsel %vm1270, %v1236, 0.0
    %v1279 = vsel %vm1271, %v1235, 0.0
    %v1280 = vsel %vm1272, %v1234, 0.0
    %v1281 = vsel %vm1273, %v1241, 0.0
    %v1283 = vsel %vm190, %v1274, 0
    %v1286 = vsel %vm190, %v1275, 0
    %v1289 = vsel %vm190, %v1276, 0
    %v1292 = vsel %vm190, %v1277, 0
    %v1295 = vsel %vm190, %v1278, 0
    %v1298 = vsel %vm190, %v1279, 0
    %v1301 = vsel %vm190, %v1280, 0
    %v1304 = vsel %vm190, %v1281, 0
    %1306 = vmatprep.subr.mxu0 0.0
    %1307 = vmatpush1.msra.mxu0 %v56
    %1308 = vmatprep.subr.mxu0 0.0
    %1309 = vmatpush1.msra.mxu0 %v57
    %1310 = vmatprep.subr.mxu0 0.0
    %1311 = vmatpush1.msra.mxu0 %v58
    %1312 = vmatprep.subr.mxu0 0.0
    %1313 = vmatpush1.msra.mxu0 %v59
    %1314 = vmatprep.subr.mxu0 0.0
    %1315 = vmatpush1.msra.mxu0 0.0
    %1316 = vmatprep.subr.mxu0 0.0
    %1317 = vmatpush1.msra.mxu0 0.0
    %1318 = vmatprep.subr.mxu0 0.0
    %1319 = vmatpush1.msra.mxu0 0.0
    %1320 = vmatprep.subr.mxu0 0.0
    %1321 = vmatpush1.msra.mxu0 0.0
    %1322 = vmatprep.subr.mxu0 0.0
    %1323 = vmatpush1.msra.mxu0 0.0
    %1324 = vmatprep.subr.mxu0 0.0
    %1325 = vmatpush1.msra.mxu0 0.0
    %1326 = vmatprep.subr.mxu0 0.0
    %1327 = vmatpush1.msra.mxu0 0.0
    %1328 = vmatprep.subr.mxu0 0.0
    %1329 = vmatpush1.msra.mxu0 0.0
    %1330 = vmatprep.subr.mxu0 0.0
    %1331 = vmatpush1.msra.mxu0 0.0
    %1332 = vmatprep.subr.mxu0 0.0
    %1333 = vmatpush1.msra.mxu0 0.0
    %1334 = vmatprep.subr.mxu0 0.0
    %1335 = vmatpush1.msra.mxu0 0.0
    %1336 = vmatprep.subr.mxu0 0.0
    %1337 = vmatpush1.msra.mxu0 0.0
    %1338 = vmatprep.subr.mxu0 0.0
    %1339 = vmatpush1.msra.mxu0 0.0
    %1340 = vmatprep.subr.mxu0 0.0
    %1341 = vmatpush1.msra.mxu0 0.0
    %1342 = vmatprep.subr.mxu0 0.0
    %1343 = vmatpush1.msra.mxu0 0.0
    %1344 = vmatprep.subr.mxu0 0.0
    %1345 = vmatpush1.msra.mxu0 0.0
    %1346 = vmatprep.subr.mxu0 0.0
    %1347 = vmatpush1.msra.mxu0 0.0
    %1348 = vmatprep.subr.mxu0 0.0
    %1349 = vmatpush1.msra.mxu0 0.0
    %1350 = vmatprep.subr.mxu0 0.0
    %1351 = vmatpush1.msra.mxu0 0.0
    %1352 = vmatprep.subr.mxu0 0.0
    %1353 = vmatpush1.msra.mxu0 0.0
    %1354 = vmatprep.subr.mxu0 0.0
    %1355 = vmatpush1.msra.mxu0 0.0
    %1356 = vmatprep.subr.mxu0 0.0
    %1357 = vmatpush1.msra.mxu0 0.0
    %1358 = vmatprep.subr.mxu0 0.0
    %1359 = vmatpush1.msra.mxu0 0.0
    %1360 = vmatprep.subr.mxu0 0.0
    %1361 = vmatpush1.msra.mxu0 0.0
    %1362 = vmatprep.subr.mxu0 0.0
    %1363 = vmatpush1.msra.mxu0 0.0
    %1364 = vmatprep.subr.mxu0 0.0
    %1365 = vmatpush1.msra.mxu0 0.0
    %1366 = vmatprep.subr.mxu0 0.0
    %1367 = vmatpush1.msra.mxu0 0.0
    %1368 = vmatprep.subr.mxu0 0.0
    %1369 = vmatpush1.msra.mxu0 0.0
    %1370 = vmatprep.mubr.f32.mxu0 0.0
    %1371 = vmatmul.mubr.f32.gmra.mrb[0].mxu0 %v1283
    %v1372 = vpop.f32.mrb[0].mxu0
    %v1373 = vadd.f32 0.0, %v1372
    %v1374 = vpop.f32.mrb[0].mxu0
    %1375 = vmatprep.mubr.f32.mxu0 0.0
    %1376 = vmatmul.mubr.f32.gmra.mrb[0].mxu0 %v1286
    %v1377 = vpop.f32.mrb[0].mxu0
    %v1378 = vadd.f32 0.0, %v1377
    %v1379 = vpop.f32.mrb[0].mxu0
    %1380 = vmatprep.mubr.f32.mxu0 0.0
    %1381 = vmatmul.mubr.f32.gmra.mrb[0].mxu0 %v1289
    %v1382 = vpop.f32.mrb[0].mxu0
    %v1383 = vadd.f32 0.0, %v1382
    %v1384 = vpop.f32.mrb[0].mxu0
    %1385 = vmatprep.mubr.f32.mxu0 0.0
    %1386 = vmatmul.mubr.f32.gmra.mrb[0].mxu0 %v1292
    %v1387 = vpop.f32.mrb[0].mxu0
    %v1388 = vadd.f32 0.0, %v1387
    %v1389 = vpop.f32.mrb[0].mxu0
    %1390 = vmatprep.mubr.f32.mxu0 0.0
    %1391 = vmatmul.mubr.f32.gmra.mrb[0].mxu0 %v1295
    %v1392 = vpop.f32.mrb[0].mxu0
    %v1393 = vadd.f32 0.0, %v1392
    %v1394 = vpop.f32.mrb[0].mxu0
    %1395 = vmatprep.mubr.f32.mxu0 0.0
    %1396 = vmatmul.mubr.f32.gmra.mrb[0].mxu0 %v1298
    %v1397 = vpop.f32.mrb[0].mxu0
    %v1398 = vadd.f32 0.0, %v1397
    %v1399 = vpop.f32.mrb[0].mxu0
    %1400 = vmatprep.mubr.f32.mxu0 0.0
    %1401 = vmatmul.mubr.f32.gmra.mrb[0].mxu0 %v1301
    %v1402 = vpop.f32.mrb[0].mxu0
    %v1403 = vadd.f32 0.0, %v1402
    %v1404 = vpop.f32.mrb[0].mxu0
    %1405 = vmatprep.mubr.f32.mxu0 0.0
    %1406 = vmatmul.mubr.f32.gmra.mrb[0].mxu0 %v1304
    %v1407 = vpop.f32.mrb[0].mxu0
    %v1408 = vadd.f32 0.0, %v1407
    %v1409 = vpop.f32.mrb[0].mxu0
    %1410 = vdwg.mxu0
    %v1411 = vadd.f32 %v1217, %v1373
    %v1412 = vadd.f32 %v1218, %v1378
    %v1413 = vadd.f32 %v1219, %v1383
    %v1414 = vadd.f32 %v1220, %v1388
    %v1415 = vadd.f32 %v1221, %v1393
    %v1416 = vadd.f32 %v1222, %v1398
    %v1417 = vadd.f32 %v1223, %v1403
    %v1418 = vadd.f32 %v1224, %v1408
    %v1419 = vrot.slane %v24, 3
    %v1420 = vrot.slane %v25, 3
    %v1421 = vrot.slane %v26, 3
    %v1422 = vrot.slane %v27, 3
    %v1423 = vrot.slane %v28, 3
    %v1424 = vrot.slane %v29, 3
    %v1425 = vrot.slane %v30, 3
    %v1426 = vrot.slane %v31, 3
    %vm1427 = vcmp.lt.s32.totalorder %v69, 5
    %v1428 = vsel %vm1427, %v1425, %v1426
    %v1429 = vsel %vm1427, %v1424, %v1425
    %v1430 = vsel %vm1427, %v1423, %v1424
    %v1431 = vsel %vm1427, %v1422, %v1423
    %v1432 = vsel %vm1427, %v1421, %v1422
    %v1433 = vsel %vm1427, %v1420, %v1421
    %v1434 = vsel %vm1427, %v1419, %v1420
    %v1435 = vsel %vm1427, %v1426, %v1419
    %v1436 = vadd.s32 %v83, 3
    %v1437 = vadd.s32 %v90, 3
    %v1438 = vadd.s32 %v97, 3
    %v1439 = vadd.s32 %v104, 3
    %v1440 = vadd.s32 %v111, 3
    %v1441 = vadd.s32 %v118, 3
    %v1442 = vadd.s32 %v125, 3
    %v1443 = vadd.s32 %v132, 3
    %vm1444 = vcmp.ge.s32.totalorder %v1436, 0
    %vm1445 = vcmp.ge.s32.totalorder %v1437, 0
    %vm1446 = vcmp.ge.s32.totalorder %v1438, 0
    %vm1447 = vcmp.ge.s32.totalorder %v1439, 0
    %vm1448 = vcmp.ge.s32.totalorder %v1440, 0
    %vm1449 = vcmp.ge.s32.totalorder %v1441, 0
    %vm1450 = vcmp.ge.s32.totalorder %v1442, 0
    %vm1451 = vcmp.ge.s32.totalorder %v1443, 0
    %vm1452 = vcmp.lt.s32.totalorder %v1436, 16
    %vm1453 = vcmp.lt.s32.totalorder %v1437, 16
    %vm1454 = vcmp.lt.s32.totalorder %v1438, 16
    %vm1455 = vcmp.lt.s32.totalorder %v1439, 16
    %vm1456 = vcmp.lt.s32.totalorder %v1440, 16
    %vm1457 = vcmp.lt.s32.totalorder %v1441, 16
    %vm1458 = vcmp.lt.s32.totalorder %v1442, 16
    %vm1459 = vcmp.lt.s32.totalorder %v1443, 16
    %vm1460 = vmand %vm1444, %vm1452
    %vm1461 = vmand %vm1445, %vm1453
    %vm1462 = vmand %vm1446, %vm1454
    %vm1463 = vmand %vm1447, %vm1455
    %vm1464 = vmand %vm1448, %vm1456
    %vm1465 = vmand %vm1449, %vm1457
    %vm1466 = vmand %vm1450, %vm1458
    %vm1467 = vmand %vm1451, %vm1459
    %v1468 = vsel %vm1460, %v1434, 0.0
    %v1469 = vsel %vm1461, %v1433, 0.0
    %v1470 = vsel %vm1462, %v1432, 0.0
    %v1471 = vsel %vm1463, %v1431, 0.0
    %v1472 = vsel %vm1464, %v1430, 0.0
    %v1473 = vsel %vm1465, %v1429, 0.0
    %v1474 = vsel %vm1466, %v1428, 0.0
    %v1475 = vsel %vm1467, %v1435, 0.0
    %v1477 = vsel %vm190, %v1468, 0
    %v1480 = vsel %vm190, %v1469, 0
    %v1483 = vsel %vm190, %v1470, 0
    %v1486 = vsel %vm190, %v1471, 0
    %v1489 = vsel %vm190, %v1472, 0
    %v1492 = vsel %vm190, %v1473, 0
    %v1495 = vsel %vm190, %v1474, 0
    %v1498 = vsel %vm190, %v1475, 0
    %1500 = vmatprep.subr.mxu0 0.0
    %1501 = vmatpush1.msra.mxu0 %v60
    %1502 = vmatprep.subr.mxu0 0.0
    %1503 = vmatpush1.msra.mxu0 %v61
    %1504 = vmatprep.subr.mxu0 0.0
    %1505 = vmatpush1.msra.mxu0 %v62
    %1506 = vmatprep.subr.mxu0 0.0
    %1507 = vmatpush1.msra.mxu0 %v63
    %1508 = vmatprep.subr.mxu0 0.0
    %1509 = vmatpush1.msra.mxu0 0.0
    %1510 = vmatprep.subr.mxu0 0.0
    %1511 = vmatpush1.msra.mxu0 0.0
    %1512 = vmatprep.subr.mxu0 0.0
    %1513 = vmatpush1.msra.mxu0 0.0
    %1514 = vmatprep.subr.mxu0 0.0
    %1515 = vmatpush1.msra.mxu0 0.0
    %1516 = vmatprep.subr.mxu0 0.0
    %1517 = vmatpush1.msra.mxu0 0.0
    %1518 = vmatprep.subr.mxu0 0.0
    %1519 = vmatpush1.msra.mxu0 0.0
    %1520 = vmatprep.subr.mxu0 0.0
    %1521 = vmatpush1.msra.mxu0 0.0
    %1522 = vmatprep.subr.mxu0 0.0
    %1523 = vmatpush1.msra.mxu0 0.0
    %1524 = vmatprep.subr.mxu0 0.0
    %1525 = vmatpush1.msra.mxu0 0.0
    %1526 = vmatprep.subr.mxu0 0.0
    %1527 = vmatpush1.msra.mxu0 0.0
    %1528 = vmatprep.subr.mxu0 0.0
    %1529 = vmatpush1.msra.mxu0 0.0
    %1530 = vmatprep.subr.mxu0 0.0
    %1531 = vmatpush1.msra.mxu0 0.0
    %1532 = vmatprep.subr.mxu0 0.0
    %1533 = vmatpush1.msra.mxu0 0.0
    %1534 = vmatprep.subr.mxu0 0.0
    %1535 = vmatpush1.msra.mxu0 0.0
    %1536 = vmatprep.subr.mxu0 0.0
    %1537 = vmatpush1.msra.mxu0 0.0
    %1538 = vmatprep.subr.mxu0 0.0
    %1539 = vmatpush1.msra.mxu0 0.0
    %1540 = vmatprep.subr.mxu0 0.0
    %1541 = vmatpush1.msra.mxu0 0.0
    %1542 = vmatprep.subr.mxu0 0.0
    %1543 = vmatpush1.msra.mxu0 0.0
    %1544 = vmatprep.subr.mxu0 0.0
    %1545 = vmatpush1.msra.mxu0 0.0
    %1546 = vmatprep.subr.mxu0 0.0
    %1547 = vmatpush1.msra.mxu0 0.0
    %1548 = vmatprep.subr.mxu0 0.0
    %1549 = vmatpush1.msra.mxu0 0.0
    %1550 = vmatprep.subr.mxu0 0.0
    %1551 = vmatpush1.msra.mxu0 0.0
    %1552 = vmatprep.subr.mxu0 0.0
    %1553 = vmatpush1.msra.mxu0 0.0
    %1554 = vmatprep.subr.mxu0 0.0
    %1555 = vmatpush1.msra.mxu0 0.0
    %1556 = vmatprep.subr.mxu0 0.0
    %1557 = vmatpush1.msra.mxu0 0.0
    %1558 = vmatprep.subr.mxu0 0.0
    %1559 = vmatpush1.msra.mxu0 0.0
    %1560 = vmatprep.subr.mxu0 0.0
    %1561 = vmatpush1.msra.mxu0 0.0
    %1562 = vmatprep.subr.mxu0 0.0
    %1563 = vmatpush1.msra.mxu0 0.0
    %1564 = vmatprep.mubr.f32.mxu0 0.0
    %1565 = vmatmul.mubr.f32.gmra.mrb[0].mxu0 %v1477
    %v1566 = vpop.f32.mrb[0].mxu0
    %v1567 = vadd.f32 0.0, %v1566
    %v1568 = vpop.f32.mrb[0].mxu0
    %1569 = vmatprep.mubr.f32.mxu0 0.0
    %1570 = vmatmul.mubr.f32.gmra.mrb[0].mxu0 %v1480
    %v1571 = vpop.f32.mrb[0].mxu0
    %v1572 = vadd.f32 0.0, %v1571
    %v1573 = vpop.f32.mrb[0].mxu0
    %1574 = vmatprep.mubr.f32.mxu0 0.0
    %1575 = vmatmul.mubr.f32.gmra.mrb[0].mxu0 %v1483
    %v1576 = vpop.f32.mrb[0].mxu0
    %v1577 = vadd.f32 0.0, %v1576
    %v1578 = vpop.f32.mrb[0].mxu0
    %1579 = vmatprep.mubr.f32.mxu0 0.0
    %1580 = vmatmul.mubr.f32.gmra.mrb[0].mxu0 %v1486
    %v1581 = vpop.f32.mrb[0].mxu0
    %v1582 = vadd.f32 0.0, %v1581
    %v1583 = vpop.f32.mrb[0].mxu0
    %1584 = vmatprep.mubr.f32.mxu0 0.0
    %1585 = vmatmul.mubr.f32.gmra.mrb[0].mxu0 %v1489
    %v1586 = vpop.f32.mrb[0].mxu0
    %v1587 = vadd.f32 0.0, %v1586
    %v1588 = vpop.f32.mrb[0].mxu0
    %1589 = vmatprep.mubr.f32.mxu0 0.0
    %1590 = vmatmul.mubr.f32.gmra.mrb[0].mxu0 %v1492
    %v1591 = vpop.f32.mrb[0].mxu0
    %v1592 = vadd.f32 0.0, %v1591
    %v1593 = vpop.f32.mrb[0].mxu0
    %1594 = vmatprep.mubr.f32.mxu0 0.0
    %1595 = vmatmul.mubr.f32.gmra.mrb[0].mxu0 %v1495
    %v1596 = vpop.f32.mrb[0].mxu0
    %v1597 = vadd.f32 0.0, %v1596
    %v1598 = vpop.f32.mrb[0].mxu0
    %1599 = vmatprep.mubr.f32.mxu0 0.0
    %1600 = vmatmul.mubr.f32.gmra.mrb[0].mxu0 %v1498
    %v1601 = vpop.f32.mrb[0].mxu0
    %v1602 = vadd.f32 0.0, %v1601
    %v1603 = vpop.f32.mrb[0].mxu0
    %1604 = vdwg.mxu0
    %v1605 = vadd.f32 %v1411, %v1567
    %v1606 = vadd.f32 %v1412, %v1572
    %v1607 = vadd.f32 %v1413, %v1577
    %v1608 = vadd.f32 %v1414, %v1582
    %v1609 = vadd.f32 %v1415, %v1587
    %v1610 = vadd.f32 %v1416, %v1592
    %v1611 = vadd.f32 %v1417, %v1597
    %v1612 = vadd.f32 %v1418, %v1602
    %v1613 = vadd.s32 %v83, 4
    %v1614 = vadd.s32 %v90, 4
    %v1615 = vadd.s32 %v97, 4
    %v1616 = vadd.s32 %v104, 4
    %v1617 = vadd.s32 %v111, 4
    %v1618 = vadd.s32 %v118, 4
    %v1619 = vadd.s32 %v125, 4
    %v1620 = vadd.s32 %v132, 4
    %vm1621 = vcmp.ge.s32.totalorder %v1613, 0
    %vm1622 = vcmp.ge.s32.totalorder %v1614, 0
    %vm1623 = vcmp.ge.s32.totalorder %v1615, 0
    %vm1624 = vcmp.ge.s32.totalorder %v1616, 0
    %vm1625 = vcmp.ge.s32.totalorder %v1617, 0
    %vm1626 = vcmp.ge.s32.totalorder %v1618, 0
    %vm1627 = vcmp.ge.s32.totalorder %v1619, 0
    %vm1628 = vcmp.ge.s32.totalorder %v1620, 0
    %vm1629 = vcmp.lt.s32.totalorder %v1613, 16
    %vm1630 = vcmp.lt.s32.totalorder %v1614, 16
    %vm1631 = vcmp.lt.s32.totalorder %v1615, 16
    %vm1632 = vcmp.lt.s32.totalorder %v1616, 16
    %vm1633 = vcmp.lt.s32.totalorder %v1617, 16
    %vm1634 = vcmp.lt.s32.totalorder %v1618, 16
    %vm1635 = vcmp.lt.s32.totalorder %v1619, 16
    %vm1636 = vcmp.lt.s32.totalorder %v1620, 16
    %vm1637 = vmand %vm1621, %vm1629
    %vm1638 = vmand %vm1622, %vm1630
    %vm1639 = vmand %vm1623, %vm1631
    %vm1640 = vmand %vm1624, %vm1632
    %vm1641 = vmand %vm1625, %vm1633
    %vm1642 = vmand %vm1626, %vm1634
    %vm1643 = vmand %vm1627, %vm1635
    %vm1644 = vmand %vm1628, %vm1636
    %v1645 = vsel %vm1637, %v148, 0.0
    %v1646 = vsel %vm1638, %v147, 0.0
    %v1647 = vsel %vm1639, %v146, 0.0
    %v1648 = vsel %vm1640, %v145, 0.0
    %v1649 = vsel %vm1641, %v144, 0.0
    %v1650 = vsel %vm1642, %v143, 0.0
    %v1651 = vsel %vm1643, %v142, 0.0
    %v1652 = vsel %vm1644, %v149, 0.0
    %v1654 = vsel %vm190, %v1645, 0
    %v1657 = vsel %vm190, %v1646, 0
    %v1660 = vsel %vm190, %v1647, 0
    %v1663 = vsel %vm190, %v1648, 0
    %v1666 = vsel %vm190, %v1649, 0
    %v1669 = vsel %vm190, %v1650, 0
    %v1672 = vsel %vm190, %v1651, 0
    %v1675 = vsel %vm190, %v1652, 0
    %1677 = vmatprep.subr.mxu0 0.0
    %1678 = vmatpush1.msra.mxu0 %v64
    %1679 = vmatprep.subr.mxu0 0.0
    %1680 = vmatpush1.msra.mxu0 %v65
    %1681 = vmatprep.subr.mxu0 0.0
    %1682 = vmatpush1.msra.mxu0 %v66
    %1683 = vmatprep.subr.mxu0 0.0
    %1684 = vmatpush1.msra.mxu0 %v67
    %1685 = vmatprep.subr.mxu0 0.0
    %1686 = vmatpush1.msra.mxu0 0.0
    %1687 = vmatprep.subr.mxu0 0.0
    %1688 = vmatpush1.msra.mxu0 0.0
    %1689 = vmatprep.subr.mxu0 0.0
    %1690 = vmatpush1.msra.mxu0 0.0
    %1691 = vmatprep.subr.mxu0 0.0
    %1692 = vmatpush1.msra.mxu0 0.0
    %1693 = vmatprep.subr.mxu0 0.0
    %1694 = vmatpush1.msra.mxu0 0.0
    %1695 = vmatprep.subr.mxu0 0.0
    %1696 = vmatpush1.msra.mxu0 0.0
    %1697 = vmatprep.subr.mxu0 0.0
    %1698 = vmatpush1.msra.mxu0 0.0
    %1699 = vmatprep.subr.mxu0 0.0
    %1700 = vmatpush1.msra.mxu0 0.0
    %1701 = vmatprep.subr.mxu0 0.0
    %1702 = vmatpush1.msra.mxu0 0.0
    %1703 = vmatprep.subr.mxu0 0.0
    %1704 = vmatpush1.msra.mxu0 0.0
    %1705 = vmatprep.subr.mxu0 0.0
    %1706 = vmatpush1.msra.mxu0 0.0
    %1707 = vmatprep.subr.mxu0 0.0
    %1708 = vmatpush1.msra.mxu0 0.0
    %1709 = vmatprep.subr.mxu0 0.0
    %1710 = vmatpush1.msra.mxu0 0.0
    %1711 = vmatprep.subr.mxu0 0.0
    %1712 = vmatpush1.msra.mxu0 0.0
    %1713 = vmatprep.subr.mxu0 0.0
    %1714 = vmatpush1.msra.mxu0 0.0
    %1715 = vmatprep.subr.mxu0 0.0
    %1716 = vmatpush1.msra.mxu0 0.0
    %1717 = vmatprep.subr.mxu0 0.0
    %1718 = vmatpush1.msra.mxu0 0.0
    %1719 = vmatprep.subr.mxu0 0.0
    %1720 = vmatpush1.msra.mxu0 0.0
    %1721 = vmatprep.subr.mxu0 0.0
    %1722 = vmatpush1.msra.mxu0 0.0
    %1723 = vmatprep.subr.mxu0 0.0
    %1724 = vmatpush1.msra.mxu0 0.0
    %1725 = vmatprep.subr.mxu0 0.0
    %1726 = vmatpush1.msra.mxu0 0.0
    %1727 = vmatprep.subr.mxu0 0.0
    %1728 = vmatpush1.msra.mxu0 0.0
    %1729 = vmatprep.subr.mxu0 0.0
    %1730 = vmatpush1.msra.mxu0 0.0
    %1731 = vmatprep.subr.mxu0 0.0
    %1732 = vmatpush1.msra.mxu0 0.0
    %1733 = vmatprep.subr.mxu0 0.0
    %1734 = vmatpush1.msra.mxu0 0.0
    %1735 = vmatprep.subr.mxu0 0.0
    %1736 = vmatpush1.msra.mxu0 0.0
    %1737 = vmatprep.subr.mxu0 0.0
    %1738 = vmatpush1.msra.mxu0 0.0
    %1739 = vmatprep.subr.mxu0 0.0
    %1740 = vmatpush1.msra.mxu0 0.0
    %1741 = vmatprep.mubr.f32.mxu0 0.0
    %1742 = vmatmul.mubr.f32.gmra.mrb[0].mxu0 %v1654
    %v1743 = vpop.f32.mrb[0].mxu0
    %v1744 = vadd.f32 0.0, %v1743
    %v1745 = vpop.f32.mrb[0].mxu0
    %1746 = vmatprep.mubr.f32.mxu0 0.0
    %1747 = vmatmul.mubr.f32.gmra.mrb[0].mxu0 %v1657
    %v1748 = vpop.f32.mrb[0].mxu0
    %v1749 = vadd.f32 0.0, %v1748
    %v1750 = vpop.f32.mrb[0].mxu0
    %1751 = vmatprep.mubr.f32.mxu0 0.0
    %1752 = vmatmul.mubr.f32.gmra.mrb[0].mxu0 %v1660
    %v1753 = vpop.f32.mrb[0].mxu0
    %v1754 = vadd.f32 0.0, %v1753
    %v1755 = vpop.f32.mrb[0].mxu0
    %1756 = vmatprep.mubr.f32.mxu0 0.0
    %1757 = vmatmul.mubr.f32.gmra.mrb[0].mxu0 %v1663
    %v1758 = vpop.f32.mrb[0].mxu0
    %v1759 = vadd.f32 0.0, %v1758
    %v1760 = vpop.f32.mrb[0].mxu0
    %1761 = vmatprep.mubr.f32.mxu0 0.0
    %1762 = vmatmul.mubr.f32.gmra.mrb[0].mxu0 %v1666
    %v1763 = vpop.f32.mrb[0].mxu0
    %v1764 = vadd.f32 0.0, %v1763
    %v1765 = vpop.f32.mrb[0].mxu0
    %1766 = vmatprep.mubr.f32.mxu0 0.0
    %1767 = vmatmul.mubr.f32.gmra.mrb[0].mxu0 %v1669
    %v1768 = vpop.f32.mrb[0].mxu0
    %v1769 = vadd.f32 0.0, %v1768
    %v1770 = vpop.f32.mrb[0].mxu0
    %1771 = vmatprep.mubr.f32.mxu0 0.0
    %1772 = vmatmul.mubr.f32.gmra.mrb[0].mxu0 %v1672
    %v1773 = vpop.f32.mrb[0].mxu0
    %v1774 = vadd.f32 0.0, %v1773
    %v1775 = vpop.f32.mrb[0].mxu0
    %1776 = vmatprep.mubr.f32.mxu0 0.0
    %1777 = vmatmul.mubr.f32.gmra.mrb[0].mxu0 %v1675
    %v1778 = vpop.f32.mrb[0].mxu0
    %v1779 = vadd.f32 0.0, %v1778
    %v1780 = vpop.f32.mrb[0].mxu0
    %1781 = vdwg.mxu0
    %v1782 = vadd.f32 %v1605, %v1744
    %v1783 = vadd.f32 %v1606, %v1749
    %v1784 = vadd.f32 %v1607, %v1754
    %v1785 = vadd.f32 %v1608, %v1759
    %v1786 = vadd.f32 %v1609, %v1764
    %v1787 = vadd.f32 %v1610, %v1769
    %v1788 = vadd.f32 %v1611, %v1774
    %v1789 = vadd.f32 %v1612, %v1779
    %v1790 = vld [vmem:[%s1] sm:$0xf]
    %vm1791 = vcmask 523264
    %v1793 = vsel %vm1791, %v1790, 0
    %1795 = vmatprep.subr.mxu0 0.0
    %1796 = vmatpush1.msra.mxu0 %v1782
    %1797 = vmatprep.subr.mxu0 0.0
    %1798 = vmatpush1.msra.mxu0 %v1783
    %1799 = vmatprep.subr.mxu0 0.0
    %1800 = vmatpush1.msra.mxu0 %v1784
    %1801 = vmatprep.subr.mxu0 0.0
    %1802 = vmatpush1.msra.mxu0 %v1785
    %1803 = vmatprep.subr.mxu0 0.0
    %1804 = vmatpush1.msra.mxu0 %v1786
    %1805 = vmatprep.subr.mxu0 0.0
    %1806 = vmatpush1.msra.mxu0 %v1787
    %1807 = vmatprep.subr.mxu0 0.0
    %1808 = vmatpush1.msra.mxu0 %v1788
    %1809 = vmatprep.subr.mxu0 0.0
    %1810 = vmatpush1.msra.mxu0 %v1789
    %1811 = vmatprep.subr.mxu0 0.0
    %1812 = vmatpush1.msra.mxu0 0.0
    %1813 = vmatprep.subr.mxu0 0.0
    %1814 = vmatpush1.msra.mxu0 0.0
    %1815 = vmatprep.subr.mxu0 0.0
    %1816 = vmatpush1.msra.mxu0 0.0
    %1817 = vmatprep.subr.mxu0 0.0
    %1818 = vmatpush1.msra.mxu0 0.0
    %1819 = vmatprep.subr.mxu0 0.0
    %1820 = vmatpush1.msra.mxu0 0.0
    %1821 = vmatprep.subr.mxu0 0.0
    %1822 = vmatpush1.msra.mxu0 0.0
    %1823 = vmatprep.subr.mxu0 0.0
    %1824 = vmatpush1.msra.mxu0 0.0
    %1825 = vmatprep.subr.mxu0 0.0
    %1826 = vmatpush1.msra.mxu0 0.0
    %1827 = vmatprep.subr.mxu0 0.0
    %1828 = vmatpush1.msra.mxu0 0.0
    %1829 = vmatprep.subr.mxu0 0.0
    %1830 = vmatpush1.msra.mxu0 0.0
    %1831 = vmatprep.subr.mxu0 0.0
    %1832 = vmatpush1.msra.mxu0 0.0
    %1833 = vmatprep.subr.mxu0 0.0
    %1834 = vmatpush1.msra.mxu0 0.0
    %1835 = vmatprep.subr.mxu0 0.0
    %1836 = vmatpush1.msra.mxu0 0.0
    %1837 = vmatprep.subr.mxu0 0.0
    %1838 = vmatpush1.msra.mxu0 0.0
    %1839 = vmatprep.subr.mxu0 0.0
    %1840 = vmatpush1.msra.mxu0 0.0
    %1841 = vmatprep.subr.mxu0 0.0
    %1842 = vmatpush1.msra.mxu0 0.0
    %1843 = vmatprep.subr.mxu0 0.0
    %1844 = vmatpush1.msra.mxu0 0.0
    %1845 = vmatprep.subr.mxu0 0.0
    %1846 = vmatpush1.msra.mxu0 0.0
    %1847 = vmatprep.subr.mxu0 0.0
    %1848 = vmatpush1.msra.mxu0 0.0
    %1849 = vmatprep.subr.mxu0 0.0
    %1850 = vmatpush1.msra.mxu0 0.0
    %1851 = vmatprep.subr.mxu0 0.0
    %1852 = vmatpush1.msra.mxu0 0.0
    %1853 = vmatprep.subr.mxu0 0.0
    %1854 = vmatpush1.msra.mxu0 0.0
    %1855 = vmatprep.subr.mxu0 0.0
    %1856 = vmatpush1.msra.mxu0 0.0
    %1857 = vmatprep.subr.mxu0 0.0
    %1858 = vmatpush1.msra.mxu0 0.0
    %1859 = vmatprep.mubr.f32.mxu0 0.0
    %1860 = vmatmul.mubr.f32.gmra.mrb[0].mxu0 %v1793
    %v1861 = vpop.f32.mrb[0].mxu0
    %v1862 = vadd.f32 0.0, %v1861
    %v1863 = vpop.f32.mrb[0].mxu0
    %1864 = vdwg.mxu0
    %v1865 = vsel %vm1791, %v1782, -inf
    %v1866 = vsel %vm1791, %v1783, -inf
    %v1867 = vmax.f32 %v1865, %v1866
    %v1868 = vrot.slane %v1867, 4
    %v1869 = vmax.f32 %v1867, %v1868
    %v1870 = vrot.slane %v1869, 2
    %v1871 = vmax.f32 %v1869, %v1870
    %v1872 = vrot.slane %v1871, 1
    %v1873 = vmax.f32 %v1871, %v1872
    %v1874 = vsel %vm1791, %v1784, -inf
    %v1875 = vsel %vm1791, %v1785, -inf
    %v1876 = vmax.f32 %v1874, %v1875
    %v1877 = vrot.slane %v1876, 4
    %v1878 = vmax.f32 %v1876, %v1877
    %v1879 = vrot.slane %v1878, 2
    %v1880 = vmax.f32 %v1878, %v1879
    %v1881 = vrot.slane %v1880, 1
    %v1882 = vmax.f32 %v1880, %v1881
    %v1883 = vsel %vm1791, %v1786, -inf
    %v1884 = vsel %vm1791, %v1787, -inf
    %v1885 = vmax.f32 %v1883, %v1884
    %v1886 = vrot.slane %v1885, 4
    %v1887 = vmax.f32 %v1885, %v1886
    %v1888 = vrot.slane %v1887, 2
    %v1889 = vmax.f32 %v1887, %v1888
    %v1890 = vrot.slane %v1889, 1
    %v1891 = vmax.f32 %v1889, %v1890
    %v1892 = vsel %vm1791, %v1788, -inf
    %v1893 = vsel %vm1791, %v1789, -inf
    %v1894 = vmax.f32 %v1892, %v1893
    %v1895 = vrot.slane %v1894, 4
    %v1896 = vmax.f32 %v1894, %v1895
    %v1897 = vrot.slane %v1896, 2
    %v1898 = vmax.f32 %v1896, %v1897
    %v1899 = vrot.slane %v1898, 1
    %v1900 = vmax.f32 %v1898, %v1899
    %v1901 = vlaneseq
    %v1902 = vand.u32 %v1901, 127
    %vm1903 = vcmp.lt.s32.totalorder %v1902, 32
    %vm1908 = vcmask 1041409
    %v1909 = vsel %vm1908, %v1882, %v1873
    %vm1910 = vcmask 1042434
    %v1911 = vsel %vm1910, %v1891, %v1909
    %vm1912 = vcmask 1043459
    %v1913 = vsel %vm1912, %v1900, %v1911
    %v1915 = vsel %vm1903, %v1862, %v1913
    %v1916 = vld [vmem:[%s4] sm:$0x3]
    %v1917 = vld [vmem:[%s3] sm:$0xff]
    %v1918 = vld [vmem:[%s3 + $0x8] sm:$0xff]
    %v1919 = vld [vmem:[%s3 + $0x10] sm:$0xff]
    %v1920 = vld [vmem:[%s3 + $0x18] sm:$0xff]
    %v1921 = vld [vmem:[%s3 + $0x20] sm:$0xff]
    %v1922 = vld [vmem:[%s3 + $0x28] sm:$0xff]
    %v1923 = vld [vmem:[%s3 + $0x30] sm:$0xff]
    %v1924 = vld [vmem:[%s3 + $0x38] sm:$0xff]
    %v1925 = vlaneseq
    %v1926 = vshrl.u32 %v1925, 7
    %v1927 = vsub.s32 0, %v1926
    %v1928 = vrot.slane %v1916, %v1927
    %v1930 = vsel %vm1791, %v1915, 0
    %1932 = vmatprep.subr.mxu0 0.0
    %1933 = vmatpush1.msra.mxu0 %v1917
    %1934 = vmatprep.subr.mxu0 0.0
    %1935 = vmatpush1.msra.mxu0 %v1918
    %1936 = vmatprep.subr.mxu0 0.0
    %1937 = vmatpush1.msra.mxu0 %v1919
    %1938 = vmatprep.subr.mxu0 0.0
    %1939 = vmatpush1.msra.mxu0 %v1920
    %1940 = vmatprep.subr.mxu0 0.0
    %1941 = vmatpush1.msra.mxu0 %v1921
    %1942 = vmatprep.subr.mxu0 0.0
    %1943 = vmatpush1.msra.mxu0 %v1922
    %1944 = vmatprep.subr.mxu0 0.0
    %1945 = vmatpush1.msra.mxu0 %v1923
    %1946 = vmatprep.subr.mxu0 0.0
    %1947 = vmatpush1.msra.mxu0 %v1924
    %1948 = vmatprep.subr.mxu0 0.0
    %1949 = vmatpush1.msra.mxu0 0.0
    %1950 = vmatprep.subr.mxu0 0.0
    %1951 = vmatpush1.msra.mxu0 0.0
    %1952 = vmatprep.subr.mxu0 0.0
    %1953 = vmatpush1.msra.mxu0 0.0
    %1954 = vmatprep.subr.mxu0 0.0
    %1955 = vmatpush1.msra.mxu0 0.0
    %1956 = vmatprep.subr.mxu0 0.0
    %1957 = vmatpush1.msra.mxu0 0.0
    %1958 = vmatprep.subr.mxu0 0.0
    %1959 = vmatpush1.msra.mxu0 0.0
    %1960 = vmatprep.subr.mxu0 0.0
    %1961 = vmatpush1.msra.mxu0 0.0
    %1962 = vmatprep.subr.mxu0 0.0
    %1963 = vmatpush1.msra.mxu0 0.0
    %1964 = vmatprep.subr.mxu0 0.0
    %1965 = vmatpush1.msra.mxu0 0.0
    %1966 = vmatprep.subr.mxu0 0.0
    %1967 = vmatpush1.msra.mxu0 0.0
    %1968 = vmatprep.subr.mxu0 0.0
    %1969 = vmatpush1.msra.mxu0 0.0
    %1970 = vmatprep.subr.mxu0 0.0
    %1971 = vmatpush1.msra.mxu0 0.0
    %1972 = vmatprep.subr.mxu0 0.0
    %1973 = vmatpush1.msra.mxu0 0.0
    %1974 = vmatprep.subr.mxu0 0.0
    %1975 = vmatpush1.msra.mxu0 0.0
    %1976 = vmatprep.subr.mxu0 0.0
    %1977 = vmatpush1.msra.mxu0 0.0
    %1978 = vmatprep.subr.mxu0 0.0
    %1979 = vmatpush1.msra.mxu0 0.0
    %1980 = vmatprep.subr.mxu0 0.0
    %1981 = vmatpush1.msra.mxu0 0.0
    %1982 = vmatprep.subr.mxu0 0.0
    %1983 = vmatpush1.msra.mxu0 0.0
    %1984 = vmatprep.subr.mxu0 0.0
    %1985 = vmatpush1.msra.mxu0 0.0
    %1986 = vmatprep.subr.mxu0 0.0
    %1987 = vmatpush1.msra.mxu0 0.0
    %1988 = vmatprep.subr.mxu0 0.0
    %1989 = vmatpush1.msra.mxu0 0.0
    %1990 = vmatprep.subr.mxu0 0.0
    %1991 = vmatpush1.msra.mxu0 0.0
    %1992 = vmatprep.subr.mxu0 0.0
    %1993 = vmatpush1.msra.mxu0 0.0
    %1994 = vmatprep.subr.mxu0 0.0
    %1995 = vmatpush1.msra.mxu0 0.0
    %1996 = vmatprep.mubr.f32.mxu0 0.0
    %1997 = vmatmul.mubr.f32.gmra.mrb[0].mxu0 %v1930
    %v1998 = vpop.f32.mrb[0].mxu0
    %v1999 = vadd.f32 %v1928, %v1998
    %v2000 = vpop.f32.mrb[0].mxu0
    %2001 = vdwg.mxu0
    %v2002 = vmax.f32 %v1999, 0.0
    %v2003 = vld [vmem:[%s5] sm:$0xff]
    %v2004 = vld [vmem:[%s5 + $0x8] sm:$0xff]
    %v2005 = vld [vmem:[%s5 + $0x10] sm:$0xff]
    %v2006 = vld [vmem:[%s5 + $0x18] sm:$0xff]
    %v2007 = vlaneseq
    %v2008 = vshrl.u32 %v2007, 7
    %v2009 = vsub.s32 1, %v2008
    %v2010 = vrot.slane %v1916, %v2009
    %v2012 = vsel %vm190, %v2002, 0
    %2014 = vmatprep.subr.mxu0 0.0
    %2015 = vmatpush1.msra.mxu0 %v2003
    %2016 = vmatprep.subr.mxu0 0.0
    %2017 = vmatpush1.msra.mxu0 %v2004
    %2018 = vmatprep.subr.mxu0 0.0
    %2019 = vmatpush1.msra.mxu0 %v2005
    %2020 = vmatprep.subr.mxu0 0.0
    %2021 = vmatpush1.msra.mxu0 %v2006
    %2022 = vmatprep.subr.mxu0 0.0
    %2023 = vmatpush1.msra.mxu0 0.0
    %2024 = vmatprep.subr.mxu0 0.0
    %2025 = vmatpush1.msra.mxu0 0.0
    %2026 = vmatprep.subr.mxu0 0.0
    %2027 = vmatpush1.msra.mxu0 0.0
    %2028 = vmatprep.subr.mxu0 0.0
    %2029 = vmatpush1.msra.mxu0 0.0
    %2030 = vmatprep.subr.mxu0 0.0
    %2031 = vmatpush1.msra.mxu0 0.0
    %2032 = vmatprep.subr.mxu0 0.0
    %2033 = vmatpush1.msra.mxu0 0.0
    %2034 = vmatprep.subr.mxu0 0.0
    %2035 = vmatpush1.msra.mxu0 0.0
    %2036 = vmatprep.subr.mxu0 0.0
    %2037 = vmatpush1.msra.mxu0 0.0
    %2038 = vmatprep.subr.mxu0 0.0
    %2039 = vmatpush1.msra.mxu0 0.0
    %2040 = vmatprep.subr.mxu0 0.0
    %2041 = vmatpush1.msra.mxu0 0.0
    %2042 = vmatprep.subr.mxu0 0.0
    %2043 = vmatpush1.msra.mxu0 0.0
    %2044 = vmatprep.subr.mxu0 0.0
    %2045 = vmatpush1.msra.mxu0 0.0
    %2046 = vmatprep.subr.mxu0 0.0
    %2047 = vmatpush1.msra.mxu0 0.0
    %2048 = vmatprep.subr.mxu0 0.0
    %2049 = vmatpush1.msra.mxu0 0.0
    %2050 = vmatprep.subr.mxu0 0.0
    %2051 = vmatpush1.msra.mxu0 0.0
    %2052 = vmatprep.subr.mxu0 0.0
    %2053 = vmatpush1.msra.mxu0 0.0
    %2054 = vmatprep.subr.mxu0 0.0
    %2055 = vmatpush1.msra.mxu0 0.0
    %2056 = vmatprep.subr.mxu0 0.0
    %2057 = vmatpush1.msra.mxu0 0.0
    %2058 = vmatprep.subr.mxu0 0.0
    %2059 = vmatpush1.msra.mxu0 0.0
    %2060 = vmatprep.subr.mxu0 0.0
    %2061 = vmatpush1.msra.mxu0 0.0
    %2062 = vmatprep.subr.mxu0 0.0
    %2063 = vmatpush1.msra.mxu0 0.0
    %2064 = vmatprep.subr.mxu0 0.0
    %2065 = vmatpush1.msra.mxu0 0.0
    %2066 = vmatprep.subr.mxu0 0.0
    %2067 = vmatpush1.msra.mxu0 0.0
    %2068 = vmatprep.subr.mxu0 0.0
    %2069 = vmatpush1.msra.mxu0 0.0
    %2070 = vmatprep.subr.mxu0 0.0
    %2071 = vmatpush1.msra.mxu0 0.0
    %2072 = vmatprep.subr.mxu0 0.0
    %2073 = vmatpush1.msra.mxu0 0.0
    %2074 = vmatprep.subr.mxu0 0.0
    %2075 = vmatpush1.msra.mxu0 0.0
    %2076 = vmatprep.subr.mxu0 0.0
    %2077 = vmatpush1.msra.mxu0 0.0
    %2078 = vmatprep.mubr.f32.mxu0 0.0
    %2079 = vmatmul.mubr.f32.gmra.mrb[0].mxu0 %v2012
    %v2080 = vpop.f32.mrb[0].mxu0
    %v2081 = vadd.f32 %v2010, %v2080
    %v2082 = vpop.f32.mrb[0].mxu0
    %2083 = vdwg.mxu0
    %vm2084 = vcmask 84992
    %2085 = vst.msk [vmem:[#allocation2] sm:$0xf] %vm2084, %v2081
    // Predicated region
    $region26: #{light_attention_forward.1} parent=1 // pred_check
      _
    $region27: #{light_attention_forward.1} parent=1 // pred_check_branch
      %2087 = sbr.rel (0) target = $region29
    $region28: #{light_attention_forward.1} parent=1 // pred_region
      %s2089 = ssub.s32 64, 64
      %2090 = vsyncadd [#allocation3], %s2089
      %s2092 = sshll.u32 [#allocation2], 4
      %s2093 = int_to_ptr.vmem [resolvable:$true] %s2092
      %2095 = dma.vmem_to_hbm [thread:$0]  %s2093, 64, %s6, [#allocation3]
    $region29: #{light_attention_forward.1} parent=1 // pred_fallthru
      _
    // Predicated region
    $region30: #{light_attention_forward.1} parent=1 // pred_check
      _
    $region31: #{light_attention_forward.1} parent=1 // pred_check_branch
      %2097 = sbr.rel (0) target = $region33
    $region32: #{light_attention_forward.1} parent=1 // pred_region
      %2098 = dma.done [#allocation3], 64
    $region33: #{light_attention_forward.1} parent=1 // pred_fallthru
      _
    %2099 = vsyncpa [#allocation3], 1

</llo_original>
